<compile_context>
chip_gen: v6e
topology: v6e:2x2x1
jax: 0.10.0
libtpu: 0.0.40
codegen_flags: <defaults>
</compile_context>

<pallas_src>
import jax
import jax.numpy as jnp
from jax import lax
from jax.experimental import pallas as pl
from jax.experimental.pallas import tpu as pltpu


def _patch_embed_kernel(x_ref, w_ref, b_ref, o_ref):
    # x_ref: (bB, C, HW) f32 | w_ref: (C, E) bf16 | b_ref: (1, E) f32
    # o_ref: (bB, HW, E) out_dtype
    w = w_ref[...]                        # (C, E) bf16, resident across the grid
    b = b_ref[...]                        # (1, E) f32
    # Static (block-shape) loop over batch rows in this block: 1 on the
    # batch-parallel (v7x) path, B on the collapsed single-step path.
    for i in range(x_ref.shape[0]):
        # In-kernel bf16 cast (VPU, hidden under the DMA) -- avoids
        # materializing a bf16 copy of x in HBM from the wrapper.
        xi = x_ref[i].astype(w.dtype)     # (C, HW)
        # Contract on C (dim 0 of both operands): the NCHW->NHWC transpose is
        # fused into the MXU contraction, no HBM transpose pass.
        acc = lax.dot_general(
            xi, w,
            dimension_numbers=(((0,), (0,)), ((), ())),
            preferred_element_type=jnp.float32,
        )                                 # (HW, E) f32
        # f32 epilogue (bias add); cast only at the store.
        o_ref[i] = (acc + b).astype(o_ref.dtype)


def init_patch_embed_params(w_conv, bias, *, compute_dtype=jnp.bfloat16):
    """One-time parameter prep (== PyTorch module init).

    w_conv: Conv2d weight (E, C, 1, 1) or (E, C);  bias: (E,)
    Returns (w_mat, bias2): w_mat (C, E) already in compute_dtype (so the
    per-call wrapper never re-casts it), bias2 (1, E) f32 (epilogue stays f32).
    """
    if w_conv.ndim == 4:
        w_conv = w_conv[:, :, 0, 0]
    w_mat = jnp.transpose(w_conv, (1, 0)).astype(compute_dtype)    # (C, E)
    bias2 = bias.reshape(1, -1).astype(jnp.float32)                # (1, E)
    return w_mat, bias2


def _two_tensorcores_per_chip():
    # v7x has 2 TensorCores per chip -> keep the batch grid parallel there;
    # v5e/v6e are single-TC so a B-step grid is just serial-loop overhead.
    try:
        return "v7" in jax.devices()[0].device_kind.lower()
    except Exception:
        return False


def patch_embed(x, w_mat, bias2, *, out_dtype=jnp.float32, batch_parallel=None):
    """x: (B, C, H, W) f32; w_mat: (C, E) pre-cast (e.g. bf16); bias2: (1, E) f32.
    Returns (B, H*W, E) in out_dtype (default f32 == PyTorch semantics)."""
    B, C, H, W = x.shape
    E = w_mat.shape[1]
    HW = H * W

    if batch_parallel is None:
        batch_parallel = _two_tensorcores_per_chip()

    # Free reshape only (no cast, no transpose materialized in HBM).
    x3 = x.reshape(B, C, HW)
    bB = 1 if batch_parallel else B          # batch rows per grid step
    grid = (B // bB,)

    w_bytes = jnp.dtype(w_mat.dtype).itemsize
    out_bytes = jnp.dtype(out_dtype).itemsize
    cost = pl.CostEstimate(
        flops=2 * B * HW * C * E,
        transcendentals=0,
        bytes_accessed=(B * C * HW * x3.dtype.itemsize + C * E * w_bytes
                        + E * 4 + B * HW * E * out_bytes),
    )

    # TODO(synk): if B*HW grows large (big batch / high-res), tile HW in
    # >=512-row multiples of 128 (put HW, not B, on the parallel axis for v7x),
    # single-buffer the resident weight/bias blocks (pipeline_mode=pl.Buffered(1))
    # and set vmem_limit_bytes explicitly -- v7x has only 64 MiB physical VMEM.
    out = pl.pallas_call(
        _patch_embed_kernel,
        out_shape=jax.ShapeDtypeStruct((B, HW, E), out_dtype),
        grid_spec=pltpu.PrefetchScalarGridSpec(
            num_scalar_prefetch=0,
            grid=grid,
            in_specs=[
                pl.BlockSpec((bB, C, HW), lambda b: (b, 0, 0)),  # activations (f32)
                pl.BlockSpec((C, E), lambda b: (0, 0)),          # weight, resident
                pl.BlockSpec((1, E), lambda b: (0, 0)),          # bias, resident
            ],
            out_specs=pl.BlockSpec((bB, HW, E), lambda b: (b, 0, 0)),
        ),
        compiler_params=pltpu.CompilerParams(
            # "parallel" only pays on v7x's two TensorCores; the collapsed
            # single-step grid on v5e/v6e avoids per-step overhead on a ~µs kernel.
            dimension_semantics=("parallel",) if batch_parallel else ("arbitrary",),
        ),
        cost_estimate=cost,
    )(x3, w_mat, bias2)

    return out  # (B, H*W, E), matches .flatten(2).transpose(1, 2)


if __name__ == "__main__":
    # Module-implied shapes: img_size=14, in_c=256 (hardcoded), embed_dim=768.
    B, C, H, W = 2, 256, 14, 14
    E = 768

    key = jax.random.PRNGKey(0)
    kx, kw, kb = jax.random.split(key, 3)

    x = jax.random.normal(kx, (B, C, H, W), dtype=jnp.float32)
    # PyTorch Conv2d weight is (E, C, 1, 1); equivalent GEMM matrix is (C, E).
    w_conv = jax.random.normal(kw, (E, C, 1, 1), dtype=jnp.float32) * 0.02
    bias = jax.random.normal(kb, (E,), dtype=jnp.float32) * 0.02

    # One-time weight prep (== module init): (C, E) bf16 weight + (1, E) f32 bias.
    w_mat, bias2 = init_patch_embed_params(w_conv, bias)

    fn = jax.jit(patch_embed, static_argnames=("out_dtype", "batch_parallel"))
    out = jax.block_until_ready(fn(x, w_mat, bias2))
    assert out.shape == (B, H * W, E), out.shape
    assert out.dtype == jnp.float32, out.dtype

    # Reference with the same bf16 operands / f32 accumulation as the kernel.
    w_f32 = jnp.transpose(w_conv[:, :, 0, 0], (1, 0))
    ref = (jnp.einsum(
        "bchw,ce->bhwe",
        x.astype(jnp.bfloat16), w_f32.astype(jnp.bfloat16),
        preferred_element_type=jnp.float32,
    ).reshape(B, H * W, E) + bias)
    assert jnp.allclose(out, ref, atol=1e-2, rtol=1e-2), float(
        jnp.max(jnp.abs(out - ref)))

    # Sanity vs full-f32 reference (loose tolerance for bf16 operand rounding).
    ref32 = jnp.einsum("bchw,ce->bhwe", x, w_f32).reshape(B, H * W, E) + bias
    assert jnp.allclose(out, ref32, atol=5e-2, rtol=5e-2), float(
        jnp.max(jnp.abs(out - ref32)))

    print("KERNEL_OK")
</pallas_src>

<mosaic_0001>
module attributes {stable_mosaic.version = 11 : i64} {
  func.func @_patch_embed_kernel(%arg0: i32, %arg1: memref<2x256x196xf32, #tpu.memory_space<vmem>>, %arg2: memref<256x768xbf16, #tpu.memory_space<vmem>>, %arg3: memref<1x768xf32, #tpu.memory_space<vmem>>, %arg4: memref<2x196x768xf32, #tpu.memory_space<vmem>>) attributes {dimension_semantics = [#tpu.dimension_semantics<arbitrary>], iteration_bounds = array<i64: 1>, scalar_prefetch = 0 : i64, scratch_operands = 0 : i64, tpu.core_type = #tpu.core_type<tc>, window_params = [{transform_indices = @transform_0, window_bounds = array<i64: 2, 256, 196>}, {pipeline_mode = #tpu.pipeline_mode<synchronous>, transform_indices = @transform_1, window_bounds = array<i64: 256, 768>}, {pipeline_mode = #tpu.pipeline_mode<synchronous>, transform_indices = @transform_2, window_bounds = array<i64: 1, 768>}, {transform_indices = @transform_3, window_bounds = array<i64: 2, 196, 768>}]} {
    %c0 = arith.constant 0 : index
    %c0_0 = arith.constant 0 : index
    %0 = vector.load %arg2[%c0, %c0_0] : memref<256x768xbf16, #tpu.memory_space<vmem>>, vector<256x768xbf16>
    %c0_1 = arith.constant 0 : index
    %c0_2 = arith.constant 0 : index
    %1 = vector.load %arg3[%c0_1, %c0_2] : memref<1x768xf32, #tpu.memory_space<vmem>>, vector<1x768xf32>
    %c0_3 = arith.constant 0 : index
    %c0_4 = arith.constant 0 : index
    %c0_5 = arith.constant 0 : index
    %2 = vector.load %arg1[%c0_3, %c0_4, %c0_5] : memref<2x256x196xf32, #tpu.memory_space<vmem>>, vector<1x256x196xf32>
    %3 = vector.shape_cast %2 : vector<1x256x196xf32> to vector<256x196xf32>
    %4 = arith.truncf %3 : vector<256x196xf32> to vector<256x196xbf16>
    %cst = arith.constant dense<0.000000e+00> : vector<196x768xf32>
    %5 = tpu.matmul %4, %0, %cst {dimension_numbers = #tpu.dot_dimension_numbers<[0], [0], [1], [1], [0, 1, 1, 1], [], []>} : vector<256x196xbf16>, vector<256x768xbf16>, vector<196x768xf32> -> vector<196x768xf32>
    %6 = vector.broadcast %1 : vector<1x768xf32> to vector<196x768xf32>
    %7 = arith.addf %5, %6 : vector<196x768xf32>
    %c0_6 = arith.constant 0 : index
    %c0_7 = arith.constant 0 : index
    %c0_8 = arith.constant 0 : index
    %8 = vector.load %arg4[%c0_6, %c0_7, %c0_8] : memref<2x196x768xf32, #tpu.memory_space<vmem>>, vector<1x196x768xf32>
    %9 = vector.shape_cast %8 : vector<1x196x768xf32> to vector<196x768xf32>
    %10 = vector.shape_cast %7 : vector<196x768xf32> to vector<1x196x768xf32>
    tpu.vector_store %arg4[%c0_6, %c0_7, %c0_8], %10 {strides = array<i32>} : memref<2x196x768xf32, #tpu.memory_space<vmem>>, vector<1x196x768xf32>,
    %c1 = arith.constant 1 : index
    %c0_9 = arith.constant 0 : index
    %c0_10 = arith.constant 0 : index
    %11 = vector.load %arg1[%c1, %c0_9, %c0_10] : memref<2x256x196xf32, #tpu.memory_space<vmem>>, vector<1x256x196xf32>
    %12 = vector.shape_cast %11 : vector<1x256x196xf32> to vector<256x196xf32>
    %13 = arith.truncf %12 : vector<256x196xf32> to vector<256x196xbf16>
    %cst_11 = arith.constant dense<0.000000e+00> : vector<196x768xf32>
    %14 = tpu.matmul %13, %0, %cst_11 {dimension_numbers = #tpu.dot_dimension_numbers<[0], [0], [1], [1], [0, 1, 1, 1], [], []>} : vector<256x196xbf16>, vector<256x768xbf16>, vector<196x768xf32> -> vector<196x768xf32>
    %15 = vector.broadcast %1 : vector<1x768xf32> to vector<196x768xf32>
    %16 = arith.addf %14, %15 : vector<196x768xf32>
    %c1_12 = arith.constant 1 : index
    %c0_13 = arith.constant 0 : index
    %c0_14 = arith.constant 0 : index
    %17 = vector.load %arg4[%c1_12, %c0_13, %c0_14] : memref<2x196x768xf32, #tpu.memory_space<vmem>>, vector<1x196x768xf32>
    %18 = vector.shape_cast %17 : vector<1x196x768xf32> to vector<196x768xf32>
    %19 = vector.shape_cast %16 : vector<196x768xf32> to vector<1x196x768xf32>
    tpu.vector_store %arg4[%c1_12, %c0_13, %c0_14], %19 {strides = array<i32>} : memref<2x196x768xf32, #tpu.memory_space<vmem>>, vector<1x196x768xf32>,
    return
  }
  func.func @transform_0(%arg0: i32) -> (i32, i32, i32) {
    %c0_i32 = arith.constant 0 : i32
    %c0_i32_0 = arith.constant 0 : i32
    %c0_i32_1 = arith.constant 0 : i32
    return %arg0, %c0_i32, %c0_i32_0 : i32, i32, i32
  }
  func.func @transform_1(%arg0: i32) -> (i32, i32) {
    %c0_i32 = arith.constant 0 : i32
    %c0_i32_0 = arith.constant 0 : i32
    %c0_i32_1 = arith.constant 0 : i32
    return %c0_i32, %c0_i32_0 : i32, i32
  }
  func.func @transform_2(%arg0: i32) -> (i32, i32) {
    %c0_i32 = arith.constant 0 : i32
    %c0_i32_0 = arith.constant 0 : i32
    %c0_i32_1 = arith.constant 0 : i32
    return %c0_i32, %c0_i32_0 : i32, i32
  }
  func.func @transform_3(%arg0: i32) -> (i32, i32, i32) {
    %c0_i32 = arith.constant 0 : i32
    %c0_i32_0 = arith.constant 0 : i32
    %c0_i32_1 = arith.constant 0 : i32
    return %arg0, %c0_i32, %c0_i32_0 : i32, i32, i32
  }
}

</mosaic_0001>

<llo_original>
// kernel: patch_embed.1
$region0: #{patch_embed.1}
  #allocation0 [shape = 'u32[]', space=smem, size = 0x4, offset = 0x4, fixed_abs, tag = 'smem constant byte address 0x4 - core index']
  #allocation1 [shape = 'u32[144,128]{1,0:T(1,128)}', space=vmem, size = 0x12000, scoped, tag = 'internal scratch']
  %s0 = inlined_call_operand.vmem [shape: f32[2,256,196], index: 0, kind: input, shape index: {}]
  %s1 = inlined_call_operand.vmem [shape: bf16[256,768], index: 1, kind: input, shape index: {}]
  %s2 = inlined_call_operand.hbm [shape: f32[1,768], index: 2, kind: input, shape index: {}]
  %s3 = inlined_call_operand.vmem [shape: f32[2,196,768], index: 3, kind: output, shape index: {}]
  %s4 = sld [smem:[#allocation0]]
  $region26: #{patch_embed.1} parent=0
    _
  %s6 = ssub.s32 1, %s4
  %s7 = scalar_select 0, %s6, %s4
  $region1: #{patch_embed.1} parent=0
    #allocation2 [shape = 'u8[3072]{0}', space=vmem, size = 0xc00, scoped, tag = 'input window, operand 2, single buffered']
    #allocation3 [shape = 's32[1]{0}', space=sflag, size = 0x4, scoped, tag = 'scoped memory for patch_embed.1']
    %8 = vsyncpa [#allocation3], 0
    // Predicated region
    $region2: #{patch_embed.1} parent=1 // pred_check
      _
    $region3: #{patch_embed.1} parent=1 // pred_check_branch
      %10 = sbr.rel (0) target = $region5
    $region4: #{patch_embed.1} parent=1 // pred_region
      _
    $region5: #{patch_embed.1} parent=1 // pred_fallthru
      _
    // Predicated region
    $region6: #{patch_embed.1} parent=1 // pred_check
      _
    $region7: #{patch_embed.1} parent=1 // pred_check_branch
      %12 = sbr.rel (0) target = $region9
    $region8: #{patch_embed.1} parent=1 // pred_region
      _
    $region9: #{patch_embed.1} parent=1 // pred_fallthru
      _
    // Predicated region
    $region10: #{patch_embed.1} parent=1 // pred_check
      _
    $region11: #{patch_embed.1} parent=1 // pred_check_branch
      %14 = sbr.rel (0) target = $region13
    $region12: #{patch_embed.1} parent=1 // pred_region
      %s16 = ssub.s32 96, 96
      %17 = vsyncadd [#allocation3], %s16
      %s19 = sshll.u32 [#allocation2], 4
      %s20 = int_to_ptr.vmem [resolvable:$true] %s19
      %22 = dma.hbm_to_vmem [thread:$0]  %s2, 96, %s20, [#allocation3]
    $region13: #{patch_embed.1} parent=1 // pred_fallthru
      _
    // Predicated region
    $region14: #{patch_embed.1} parent=1 // pred_check
      _
    $region15: #{patch_embed.1} parent=1 // pred_check_branch
      %24 = sbr.rel (0) target = $region17
    $region16: #{patch_embed.1} parent=1 // pred_region
      %25 = dma.done [#allocation3], 96
    $region17: #{patch_embed.1} parent=1 // pred_fallthru
      _
    %v26 = vld [vmem:[%s1] sm:$0xff]
    %v27 = vld [vmem:[%s1 + $0x8] sm:$0xff]
    %v28 = vld [vmem:[%s1 + $0x10] sm:$0xff]
    %v29 = vld [vmem:[%s1 + $0x18] sm:$0xff]
    %v30 = vld [vmem:[%s1 + $0x20] sm:$0xff]
    %v31 = vld [vmem:[%s1 + $0x28] sm:$0xff]
    %v32 = vld [vmem:[%s1 + $0x30] sm:$0xff]
    %v33 = vld [vmem:[%s1 + $0x38] sm:$0xff]
    %v34 = vld [vmem:[%s1 + $0x40] sm:$0xff]
    %v35 = vld [vmem:[%s1 + $0x48] sm:$0xff]
    %v36 = vld [vmem:[%s1 + $0x50] sm:$0xff]
    %v37 = vld [vmem:[%s1 + $0x58] sm:$0xff]
    %v38 = vld [vmem:[%s1 + $0x60] sm:$0xff]
    %v39 = vld [vmem:[%s1 + $0x68] sm:$0xff]
    %v40 = vld [vmem:[%s1 + $0x70] sm:$0xff]
    %v41 = vld [vmem:[%s1 + $0x78] sm:$0xff]
    %v42 = vld [vmem:[%s1 + $0x80] sm:$0xff]
    %v43 = vld [vmem:[%s1 + $0x88] sm:$0xff]
    %v44 = vld [vmem:[%s1 + $0x90] sm:$0xff]
    %v45 = vld [vmem:[%s1 + $0x98] sm:$0xff]
    %v46 = vld [vmem:[%s1 + $0xa0] sm:$0xff]
    %v47 = vld [vmem:[%s1 + $0xa8] sm:$0xff]
    %v48 = vld [vmem:[%s1 + $0xb0] sm:$0xff]
    %v49 = vld [vmem:[%s1 + $0xb8] sm:$0xff]
    %v50 = vld [vmem:[%s1 + $0xc0] sm:$0xff]
    %v51 = vld [vmem:[%s1 + $0xc8] sm:$0xff]
    %v52 = vld [vmem:[%s1 + $0xd0] sm:$0xff]
    %v53 = vld [vmem:[%s1 + $0xd8] sm:$0xff]
    %v54 = vld [vmem:[%s1 + $0xe0] sm:$0xff]
    %v55 = vld [vmem:[%s1 + $0xe8] sm:$0xff]
    %v56 = vld [vmem:[%s1 + $0xf0] sm:$0xff]
    %v57 = vld [vmem:[%s1 + $0xf8] sm:$0xff]
    %v58 = vld [vmem:[%s1 + $0x100] sm:$0xff]
    %v59 = vld [vmem:[%s1 + $0x108] sm:$0xff]
    %v60 = vld [vmem:[%s1 + $0x110] sm:$0xff]
    %v61 = vld [vmem:[%s1 + $0x118] sm:$0xff]
    %v62 = vld [vmem:[%s1 + $0x120] sm:$0xff]
    %v63 = vld [vmem:[%s1 + $0x128] sm:$0xff]
    %v64 = vld [vmem:[%s1 + $0x130] sm:$0xff]
    %v65 = vld [vmem:[%s1 + $0x138] sm:$0xff]
    %v66 = vld [vmem:[%s1 + $0x140] sm:$0xff]
    %v67 = vld [vmem:[%s1 + $0x148] sm:$0xff]
    %v68 = vld [vmem:[%s1 + $0x150] sm:$0xff]
    %v69 = vld [vmem:[%s1 + $0x158] sm:$0xff]
    %v70 = vld [vmem:[%s1 + $0x160] sm:$0xff]
    %v71 = vld [vmem:[%s1 + $0x168] sm:$0xff]
    %v72 = vld [vmem:[%s1 + $0x170] sm:$0xff]
    %v73 = vld [vmem:[%s1 + $0x178] sm:$0xff]
    %v74 = vld [vmem:[%s1 + $0x180] sm:$0xff]
    %v75 = vld [vmem:[%s1 + $0x188] sm:$0xff]
    %v76 = vld [vmem:[%s1 + $0x190] sm:$0xff]
    %v77 = vld [vmem:[%s1 + $0x198] sm:$0xff]
    %v78 = vld [vmem:[%s1 + $0x1a0] sm:$0xff]
    %v79 = vld [vmem:[%s1 + $0x1a8] sm:$0xff]
    %v80 = vld [vmem:[%s1 + $0x1b0] sm:$0xff]
    %v81 = vld [vmem:[%s1 + $0x1b8] sm:$0xff]
    %v82 = vld [vmem:[%s1 + $0x1c0] sm:$0xff]
    %v83 = vld [vmem:[%s1 + $0x1c8] sm:$0xff]
    %v84 = vld [vmem:[%s1 + $0x1d0] sm:$0xff]
    %v85 = vld [vmem:[%s1 + $0x1d8] sm:$0xff]
    %v86 = vld [vmem:[%s1 + $0x1e0] sm:$0xff]
    %v87 = vld [vmem:[%s1 + $0x1e8] sm:$0xff]
    %v88 = vld [vmem:[%s1 + $0x1f0] sm:$0xff]
    %v89 = vld [vmem:[%s1 + $0x1f8] sm:$0xff]
    %v90 = vld [vmem:[%s1 + $0x200] sm:$0xff]
    %v91 = vld [vmem:[%s1 + $0x208] sm:$0xff]
    %v92 = vld [vmem:[%s1 + $0x210] sm:$0xff]
    %v93 = vld [vmem:[%s1 + $0x218] sm:$0xff]
    %v94 = vld [vmem:[%s1 + $0x220] sm:$0xff]
    %v95 = vld [vmem:[%s1 + $0x228] sm:$0xff]
    %v96 = vld [vmem:[%s1 + $0x230] sm:$0xff]
    %v97 = vld [vmem:[%s1 + $0x238] sm:$0xff]
    %v98 = vld [vmem:[%s1 + $0x240] sm:$0xff]
    %v99 = vld [vmem:[%s1 + $0x248] sm:$0xff]
    %v100 = vld [vmem:[%s1 + $0x250] sm:$0xff]
    %v101 = vld [vmem:[%s1 + $0x258] sm:$0xff]
    %v102 = vld [vmem:[%s1 + $0x260] sm:$0xff]
    %v103 = vld [vmem:[%s1 + $0x268] sm:$0xff]
    %v104 = vld [vmem:[%s1 + $0x270] sm:$0xff]
    %v105 = vld [vmem:[%s1 + $0x278] sm:$0xff]
    %v106 = vld [vmem:[%s1 + $0x280] sm:$0xff]
    %v107 = vld [vmem:[%s1 + $0x288] sm:$0xff]
    %v108 = vld [vmem:[%s1 + $0x290] sm:$0xff]
    %v109 = vld [vmem:[%s1 + $0x298] sm:$0xff]
    %v110 = vld [vmem:[%s1 + $0x2a0] sm:$0xff]
    %v111 = vld [vmem:[%s1 + $0x2a8] sm:$0xff]
    %v112 = vld [vmem:[%s1 + $0x2b0] sm:$0xff]
    %v113 = vld [vmem:[%s1 + $0x2b8] sm:$0xff]
    %v114 = vld [vmem:[%s1 + $0x2c0] sm:$0xff]
    %v115 = vld [vmem:[%s1 + $0x2c8] sm:$0xff]
    %v116 = vld [vmem:[%s1 + $0x2d0] sm:$0xff]
    %v117 = vld [vmem:[%s1 + $0x2d8] sm:$0xff]
    %v118 = vld [vmem:[%s1 + $0x2e0] sm:$0xff]
    %v119 = vld [vmem:[%s1 + $0x2e8] sm:$0xff]
    %v120 = vld [vmem:[%s1 + $0x2f0] sm:$0xff]
    %v121 = vld [vmem:[%s1 + $0x2f8] sm:$0xff]
    %v122 = vld [vmem:[#allocation2] sm:$0x3f]
    %v123 = vld [vmem:[%s0] sm:$0xff]
    %v124 = vld [vmem:[%s0 + $0x8] sm:$0xff]
    %v125 = vld [vmem:[%s0 + $0x10] sm:$0xff]
    %v126 = vld [vmem:[%s0 + $0x18] sm:$0xff]
    %v127 = vld [vmem:[%s0 + $0x20] sm:$0xff]
    %v128 = vld [vmem:[%s0 + $0x28] sm:$0xff]
    %v129 = vld [vmem:[%s0 + $0x30] sm:$0xff]
    %v130 = vld [vmem:[%s0 + $0x38] sm:$0xff]
    %v131 = vld [vmem:[%s0 + $0x40] sm:$0xff]
    %v132 = vld [vmem:[%s0 + $0x48] sm:$0xff]
    %v133 = vld [vmem:[%s0 + $0x50] sm:$0xff]
    %v134 = vld [vmem:[%s0 + $0x58] sm:$0xff]
    %v135 = vld [vmem:[%s0 + $0x60] sm:$0xff]
    %v136 = vld [vmem:[%s0 + $0x68] sm:$0xff]
    %v137 = vld [vmem:[%s0 + $0x70] sm:$0xff]
    %v138 = vld [vmem:[%s0 + $0x78] sm:$0xff]
    %v139 = vld [vmem:[%s0 + $0x80] sm:$0xff]
    %v140 = vld [vmem:[%s0 + $0x88] sm:$0xff]
    %v141 = vld [vmem:[%s0 + $0x90] sm:$0xff]
    %v142 = vld [vmem:[%s0 + $0x98] sm:$0xff]
    %v143 = vld [vmem:[%s0 + $0xa0] sm:$0xff]
    %v144 = vld [vmem:[%s0 + $0xa8] sm:$0xff]
    %v145 = vld [vmem:[%s0 + $0xb0] sm:$0xff]
    %v146 = vld [vmem:[%s0 + $0xb8] sm:$0xff]
    %v147 = vld [vmem:[%s0 + $0xc0] sm:$0xff]
    %v148 = vld [vmem:[%s0 + $0xc8] sm:$0xff]
    %v149 = vld [vmem:[%s0 + $0xd0] sm:$0xff]
    %v150 = vld [vmem:[%s0 + $0xd8] sm:$0xff]
    %v151 = vld [vmem:[%s0 + $0xe0] sm:$0xff]
    %v152 = vld [vmem:[%s0 + $0xe8] sm:$0xff]
    %v153 = vld [vmem:[%s0 + $0xf0] sm:$0xff]
    %v154 = vld [vmem:[%s0 + $0xf8] sm:$0xff]
    %v155 = vld [vmem:[%s0 + $0x100] sm:$0xff]
    %v156 = vld [vmem:[%s0 + $0x108] sm:$0xff]
    %v157 = vld [vmem:[%s0 + $0x110] sm:$0xff]
    %v158 = vld [vmem:[%s0 + $0x118] sm:$0xff]
    %v159 = vld [vmem:[%s0 + $0x120] sm:$0xff]
    %v160 = vld [vmem:[%s0 + $0x128] sm:$0xff]
    %v161 = vld [vmem:[%s0 + $0x130] sm:$0xff]
    %v162 = vld [vmem:[%s0 + $0x138] sm:$0xff]
    %v163 = vld [vmem:[%s0 + $0x140] sm:$0xff]
    %v164 = vld [vmem:[%s0 + $0x148] sm:$0xff]
    %v165 = vld [vmem:[%s0 + $0x150] sm:$0xff]
    %v166 = vld [vmem:[%s0 + $0x158] sm:$0xff]
    %v167 = vld [vmem:[%s0 + $0x160] sm:$0xff]
    %v168 = vld [vmem:[%s0 + $0x168] sm:$0xff]
    %v169 = vld [vmem:[%s0 + $0x170] sm:$0xff]
    %v170 = vld [vmem:[%s0 + $0x178] sm:$0xff]
    %v171 = vld [vmem:[%s0 + $0x180] sm:$0xff]
    %v172 = vld [vmem:[%s0 + $0x188] sm:$0xff]
    %v173 = vld [vmem:[%s0 + $0x190] sm:$0xff]
    %v174 = vld [vmem:[%s0 + $0x198] sm:$0xff]
    %v175 = vld [vmem:[%s0 + $0x1a0] sm:$0xff]
    %v176 = vld [vmem:[%s0 + $0x1a8] sm:$0xff]
    %v177 = vld [vmem:[%s0 + $0x1b0] sm:$0xff]
    %v178 = vld [vmem:[%s0 + $0x1b8] sm:$0xff]
    %v179 = vld [vmem:[%s0 + $0x1c0] sm:$0xff]
    %v180 = vld [vmem:[%s0 + $0x1c8] sm:$0xff]
    %v181 = vld [vmem:[%s0 + $0x1d0] sm:$0xff]
    %v182 = vld [vmem:[%s0 + $0x1d8] sm:$0xff]
    %v183 = vld [vmem:[%s0 + $0x1e0] sm:$0xff]
    %v184 = vld [vmem:[%s0 + $0x1e8] sm:$0xff]
    %v185 = vld [vmem:[%s0 + $0x1f0] sm:$0xff]
    %v186 = vld [vmem:[%s0 + $0x1f8] sm:$0xff]
    %v187 = vpack.c.bf16 %v125, %v123
    %v188 = vpack.c.bf16 %v126, %v124
    %v189 = vpack.c.bf16 %v129, %v127
    %v190 = vpack.c.bf16 %v130, %v128
    %v191 = vpack.c.bf16 %v133, %v131
    %v192 = vpack.c.bf16 %v134, %v132
    %v193 = vpack.c.bf16 %v137, %v135
    %v194 = vpack.c.bf16 %v138, %v136
    %v195 = vpack.c.bf16 %v141, %v139
    %v196 = vpack.c.bf16 %v142, %v140
    %v197 = vpack.c.bf16 %v145, %v143
    %v198 = vpack.c.bf16 %v146, %v144
    %v199 = vpack.c.bf16 %v149, %v147
    %v200 = vpack.c.bf16 %v150, %v148
    %v201 = vpack.c.bf16 %v153, %v151
    %v202 = vpack.c.bf16 %v154, %v152
    %v203 = vpack.c.bf16 %v157, %v155
    %v204 = vpack.c.bf16 %v158, %v156
    %v205 = vpack.c.bf16 %v161, %v159
    %v206 = vpack.c.bf16 %v162, %v160
    %v207 = vpack.c.bf16 %v165, %v163
    %v208 = vpack.c.bf16 %v166, %v164
    %v209 = vpack.c.bf16 %v169, %v167
    %v210 = vpack.c.bf16 %v170, %v168
    %v211 = vpack.c.bf16 %v173, %v171
    %v212 = vpack.c.bf16 %v174, %v172
    %v213 = vpack.c.bf16 %v177, %v175
    %v214 = vpack.c.bf16 %v178, %v176
    %v215 = vpack.c.bf16 %v181, %v179
    %v216 = vpack.c.bf16 %v182, %v180
    %v217 = vpack.c.bf16 %v185, %v183
    %v218 = vpack.c.bf16 %v186, %v184
    %v220 = vlaneseq
    %v221 = vshrl.u32 %v220, 7
    %v222 = vsub.s32 0, %v221
    %v223 = vrot.slane %v122, %v222
    %v224 = vlaneseq
    %v225 = vshrl.u32 %v224, 7
    %v226 = vsub.s32 1, %v225
    %v227 = vrot.slane %v122, %v226
    %v228 = vlaneseq
    %v229 = vshrl.u32 %v228, 7
    %v230 = vsub.s32 2, %v229
    %v231 = vrot.slane %v122, %v230
    %v232 = vlaneseq
    %v233 = vshrl.u32 %v232, 7
    %v234 = vsub.s32 3, %v233
    %v235 = vrot.slane %v122, %v234
    %v236 = vlaneseq
    %v237 = vshrl.u32 %v236, 7
    %v238 = vsub.s32 4, %v237
    %v239 = vrot.slane %v122, %v238
    %v240 = vlaneseq
    %v241 = vshrl.u32 %v240, 7
    %v242 = vsub.s32 5, %v241
    %v243 = vrot.slane %v122, %v242
    %250 = vxpose.xlu0.c.b16.start [1/8] %v187, 128
    %251 = vxpose.xlu0.c.b16.cont [2/8] %v189, 128
    %252 = vxpose.xlu0.c.b16.cont [3/8] %v191, 128
    %253 = vxpose.xlu0.c.b16.cont [4/8] %v193, 128
    %254 = vxpose.xlu0.c.b16.cont [5/8] %v195, 128
    %255 = vxpose.xlu0.c.b16.cont [6/8] %v197, 128
    %256 = vxpose.xlu0.c.b16.cont [7/8] %v199, 128
    %257 = vxpose.xlu0.c.b16.end [8/8] %v201, 128
    %v258 = vpop.trf.xlu0
    %v259 = vpop.trf.xlu0
    %v260 = vpop.trf.xlu0
    %v261 = vpop.trf.xlu0
    %v262 = vpop.trf.xlu0
    %v263 = vpop.trf.xlu0
    %v264 = vpop.trf.xlu0
    %v265 = vpop.trf.xlu0
    %266 = vxpose.xlu0.c.b16.start [1/8] %v188, 128
    %267 = vxpose.xlu0.c.b16.cont [2/8] %v190, 128
    %268 = vxpose.xlu0.c.b16.cont [3/8] %v192, 128
    %269 = vxpose.xlu0.c.b16.cont [4/8] %v194, 128
    %270 = vxpose.xlu0.c.b16.cont [5/8] %v196, 128
    %271 = vxpose.xlu0.c.b16.cont [6/8] %v198, 128
    %272 = vxpose.xlu0.c.b16.cont [7/8] %v200, 128
    %273 = vxpose.xlu0.c.b16.end [8/8] %v202, 128
    %v274 = vpop.trf.xlu0
    %v275 = vpop.trf.xlu0
    %v276 = vpop.trf.xlu0
    %v277 = vpop.trf.xlu0
    %v278 = vpop.trf.xlu0
    %v279 = vpop.trf.xlu0
    %v280 = vpop.trf.xlu0
    %v281 = vpop.trf.xlu0
    %282 = vxpose.xlu0.c.b16.start [1/8] %v203, 128
    %283 = vxpose.xlu0.c.b16.cont [2/8] %v205, 128
    %284 = vxpose.xlu0.c.b16.cont [3/8] %v207, 128
    %285 = vxpose.xlu0.c.b16.cont [4/8] %v209, 128
    %286 = vxpose.xlu0.c.b16.cont [5/8] %v211, 128
    %287 = vxpose.xlu0.c.b16.cont [6/8] %v213, 128
    %288 = vxpose.xlu0.c.b16.cont [7/8] %v215, 128
    %289 = vxpose.xlu0.c.b16.end [8/8] %v217, 128
    %v290 = vpop.trf.xlu0
    %v291 = vpop.trf.xlu0
    %v292 = vpop.trf.xlu0
    %v293 = vpop.trf.xlu0
    %v294 = vpop.trf.xlu0
    %v295 = vpop.trf.xlu0
    %v296 = vpop.trf.xlu0
    %v297 = vpop.trf.xlu0
    %298 = vxpose.xlu0.c.b16.start [1/8] %v204, 128
    %299 = vxpose.xlu0.c.b16.cont [2/8] %v206, 128
    %300 = vxpose.xlu0.c.b16.cont [3/8] %v208, 128
    %301 = vxpose.xlu0.c.b16.cont [4/8] %v210, 128
    %302 = vxpose.xlu0.c.b16.cont [5/8] %v212, 128
    %303 = vxpose.xlu0.c.b16.cont [6/8] %v214, 128
    %304 = vxpose.xlu0.c.b16.cont [7/8] %v216, 128
    %305 = vxpose.xlu0.c.b16.end [8/8] %v218, 128
    %v306 = vpop.trf.xlu0
    %v307 = vpop.trf.xlu0
    %v308 = vpop.trf.xlu0
    %v309 = vpop.trf.xlu0
    %v310 = vpop.trf.xlu0
    %v311 = vpop.trf.xlu0
    %v312 = vpop.trf.xlu0
    %v313 = vpop.trf.xlu0
    %v410 = vunpack.c.l.b16 %v26
    %v411 = vunpack.c.h.b16 %v26
    %v412 = vunpack.c.l.b16 %v27
    %v413 = vunpack.c.h.b16 %v27
    %v414 = vunpack.c.l.b16 %v28
    %v415 = vunpack.c.h.b16 %v28
    %v416 = vunpack.c.l.b16 %v29
    %v417 = vunpack.c.h.b16 %v29
    %v418 = vunpack.c.l.b16 %v30
    %v419 = vunpack.c.h.b16 %v30
    %v420 = vunpack.c.l.b16 %v31
    %v421 = vunpack.c.h.b16 %v31
    %v422 = vunpack.c.l.b16 %v32
    %v423 = vunpack.c.h.b16 %v32
    %v424 = vunpack.c.l.b16 %v33
    %v425 = vunpack.c.h.b16 %v33
    %v426 = vunpack.c.l.b16 %v34
    %v427 = vunpack.c.h.b16 %v34
    %v428 = vunpack.c.l.b16 %v35
    %v429 = vunpack.c.h.b16 %v35
    %v430 = vunpack.c.l.b16 %v36
    %v431 = vunpack.c.h.b16 %v36
    %v432 = vunpack.c.l.b16 %v37
    %v433 = vunpack.c.h.b16 %v37
    %v434 = vunpack.c.l.b16 %v38
    %v435 = vunpack.c.h.b16 %v38
    %v436 = vunpack.c.l.b16 %v39
    %v437 = vunpack.c.h.b16 %v39
    %v438 = vunpack.c.l.b16 %v40
    %v439 = vunpack.c.h.b16 %v40
    %v440 = vunpack.c.l.b16 %v41
    %v441 = vunpack.c.h.b16 %v41
    %v442 = vunpack.c.l.b16 %v42
    %v443 = vunpack.c.h.b16 %v42
    %v444 = vunpack.c.l.b16 %v43
    %v445 = vunpack.c.h.b16 %v43
    %v446 = vunpack.c.l.b16 %v44
    %v447 = vunpack.c.h.b16 %v44
    %v448 = vunpack.c.l.b16 %v45
    %v449 = vunpack.c.h.b16 %v45
    %v450 = vunpack.c.l.b16 %v46
    %v451 = vunpack.c.h.b16 %v46
    %v452 = vunpack.c.l.b16 %v47
    %v453 = vunpack.c.h.b16 %v47
    %v454 = vunpack.c.l.b16 %v48
    %v455 = vunpack.c.h.b16 %v48
    %v456 = vunpack.c.l.b16 %v49
    %v457 = vunpack.c.h.b16 %v49
    %v458 = vunpack.c.l.b16 %v50
    %v459 = vunpack.c.h.b16 %v50
    %v460 = vunpack.c.l.b16 %v51
    %v461 = vunpack.c.h.b16 %v51
    %v462 = vunpack.c.l.b16 %v52
    %v463 = vunpack.c.h.b16 %v52
    %v464 = vunpack.c.l.b16 %v53
    %v465 = vunpack.c.h.b16 %v53
    %v466 = vunpack.c.l.b16 %v54
    %v467 = vunpack.c.h.b16 %v54
    %v468 = vunpack.c.l.b16 %v55
    %v469 = vunpack.c.h.b16 %v55
    %v470 = vunpack.c.l.b16 %v56
    %v471 = vunpack.c.h.b16 %v56
    %v472 = vunpack.c.l.b16 %v57
    %v473 = vunpack.c.h.b16 %v57
    %v474 = vunpack.c.l.b16 %v58
    %v475 = vunpack.c.h.b16 %v58
    %v476 = vunpack.c.l.b16 %v59
    %v477 = vunpack.c.h.b16 %v59
    %v478 = vunpack.c.l.b16 %v60
    %v479 = vunpack.c.h.b16 %v60
    %v480 = vunpack.c.l.b16 %v61
    %v481 = vunpack.c.h.b16 %v61
    %v482 = vunpack.c.l.b16 %v62
    %v483 = vunpack.c.h.b16 %v62
    %v484 = vunpack.c.l.b16 %v63
    %v485 = vunpack.c.h.b16 %v63
    %v486 = vunpack.c.l.b16 %v64
    %v487 = vunpack.c.h.b16 %v64
    %v488 = vunpack.c.l.b16 %v65
    %v489 = vunpack.c.h.b16 %v65
    %v490 = vunpack.c.l.b16 %v66
    %v491 = vunpack.c.h.b16 %v66
    %v492 = vunpack.c.l.b16 %v67
    %v493 = vunpack.c.h.b16 %v67
    %v494 = vunpack.c.l.b16 %v68
    %v495 = vunpack.c.h.b16 %v68
    %v496 = vunpack.c.l.b16 %v69
    %v497 = vunpack.c.h.b16 %v69
    %v498 = vunpack.c.l.b16 %v70
    %v499 = vunpack.c.h.b16 %v70
    %v500 = vunpack.c.l.b16 %v71
    %v501 = vunpack.c.h.b16 %v71
    %v502 = vunpack.c.l.b16 %v72
    %v503 = vunpack.c.h.b16 %v72
    %v504 = vunpack.c.l.b16 %v73
    %v505 = vunpack.c.h.b16 %v73
    %v506 = vunpack.c.l.b16 %v74
    %v507 = vunpack.c.h.b16 %v74
    %v508 = vunpack.c.l.b16 %v75
    %v509 = vunpack.c.h.b16 %v75
    %v510 = vunpack.c.l.b16 %v76
    %v511 = vunpack.c.h.b16 %v76
    %v512 = vunpack.c.l.b16 %v77
    %v513 = vunpack.c.h.b16 %v77
    %v514 = vunpack.c.l.b16 %v78
    %v515 = vunpack.c.h.b16 %v78
    %v516 = vunpack.c.l.b16 %v79
    %v517 = vunpack.c.h.b16 %v79
    %v518 = vunpack.c.l.b16 %v80
    %v519 = vunpack.c.h.b16 %v80
    %v520 = vunpack.c.l.b16 %v81
    %v521 = vunpack.c.h.b16 %v81
    %v522 = vunpack.c.l.b16 %v82
    %v523 = vunpack.c.h.b16 %v82
    %v524 = vunpack.c.l.b16 %v83
    %v525 = vunpack.c.h.b16 %v83
    %v526 = vunpack.c.l.b16 %v84
    %v527 = vunpack.c.h.b16 %v84
    %v528 = vunpack.c.l.b16 %v85
    %v529 = vunpack.c.h.b16 %v85
    %v530 = vunpack.c.l.b16 %v86
    %v531 = vunpack.c.h.b16 %v86
    %v532 = vunpack.c.l.b16 %v87
    %v533 = vunpack.c.h.b16 %v87
    %v534 = vunpack.c.l.b16 %v88
    %v535 = vunpack.c.h.b16 %v88
    %v536 = vunpack.c.l.b16 %v89
    %v537 = vunpack.c.h.b16 %v89
    %v538 = vunpack.c.l.b16 %v90
    %v539 = vunpack.c.h.b16 %v90
    %v540 = vunpack.c.l.b16 %v91
    %v541 = vunpack.c.h.b16 %v91
    %v542 = vunpack.c.l.b16 %v92
    %v543 = vunpack.c.h.b16 %v92
    %v544 = vunpack.c.l.b16 %v93
    %v545 = vunpack.c.h.b16 %v93
    %v546 = vunpack.c.l.b16 %v94
    %v547 = vunpack.c.h.b16 %v94
    %v548 = vunpack.c.l.b16 %v95
    %v549 = vunpack.c.h.b16 %v95
    %v550 = vunpack.c.l.b16 %v96
    %v551 = vunpack.c.h.b16 %v96
    %v552 = vunpack.c.l.b16 %v97
    %v553 = vunpack.c.h.b16 %v97
    %v554 = vunpack.c.l.b16 %v98
    %v555 = vunpack.c.h.b16 %v98
    %v556 = vunpack.c.l.b16 %v99
    %v557 = vunpack.c.h.b16 %v99
    %v558 = vunpack.c.l.b16 %v100
    %v559 = vunpack.c.h.b16 %v100
    %v560 = vunpack.c.l.b16 %v101
    %v561 = vunpack.c.h.b16 %v101
    %v562 = vunpack.c.l.b16 %v102
    %v563 = vunpack.c.h.b16 %v102
    %v564 = vunpack.c.l.b16 %v103
    %v565 = vunpack.c.h.b16 %v103
    %v566 = vunpack.c.l.b16 %v104
    %v567 = vunpack.c.h.b16 %v104
    %v568 = vunpack.c.l.b16 %v105
    %v569 = vunpack.c.h.b16 %v105
    %v570 = vunpack.c.l.b16 %v106
    %v571 = vunpack.c.h.b16 %v106
    %v572 = vunpack.c.l.b16 %v107
    %v573 = vunpack.c.h.b16 %v107
    %v574 = vunpack.c.l.b16 %v108
    %v575 = vunpack.c.h.b16 %v108
    %v576 = vunpack.c.l.b16 %v109
    %v577 = vunpack.c.h.b16 %v109
    %v578 = vunpack.c.l.b16 %v110
    %v579 = vunpack.c.h.b16 %v110
    %v580 = vunpack.c.l.b16 %v111
    %v581 = vunpack.c.h.b16 %v111
    %v582 = vunpack.c.l.b16 %v112
    %v583 = vunpack.c.h.b16 %v112
    %v584 = vunpack.c.l.b16 %v113
    %v585 = vunpack.c.h.b16 %v113
    %v586 = vunpack.c.l.b16 %v114
    %v587 = vunpack.c.h.b16 %v114
    %v588 = vunpack.c.l.b16 %v115
    %v589 = vunpack.c.h.b16 %v115
    %v590 = vunpack.c.l.b16 %v116
    %v591 = vunpack.c.h.b16 %v116
    %v592 = vunpack.c.l.b16 %v117
    %v593 = vunpack.c.h.b16 %v117
    %v594 = vunpack.c.l.b16 %v118
    %v595 = vunpack.c.h.b16 %v118
    %v596 = vunpack.c.l.b16 %v119
    %v597 = vunpack.c.h.b16 %v119
    %v598 = vunpack.c.l.b16 %v120
    %v599 = vunpack.c.h.b16 %v120
    %v600 = vunpack.c.l.b16 %v121
    %v601 = vunpack.c.h.b16 %v121
    %v602 = vpack.c.b16 %v416, %v410
    %v603 = vpack.c.b16 %v417, %v411
    %v604 = vpack.c.b16 %v418, %v412
    %v605 = vpack.c.b16 %v419, %v413
    %v606 = vpack.c.b16 %v420, %v414
    %v607 = vpack.c.b16 %v421, %v415
    %v608 = vpack.c.b16 %v428, %v422
    %v609 = vpack.c.b16 %v429, %v423
    %v610 = vpack.c.b16 %v430, %v424
    %v611 = vpack.c.b16 %v431, %v425
    %v612 = vpack.c.b16 %v432, %v426
    %v613 = vpack.c.b16 %v433, %v427
    %v614 = vpack.c.b16 %v440, %v434
    %v615 = vpack.c.b16 %v441, %v435
    %v616 = vpack.c.b16 %v442, %v436
    %v617 = vpack.c.b16 %v443, %v437
    %v618 = vpack.c.b16 %v444, %v438
    %v619 = vpack.c.b16 %v445, %v439
    %v620 = vpack.c.b16 %v452, %v446
    %v621 = vpack.c.b16 %v453, %v447
    %v622 = vpack.c.b16 %v454, %v448
    %v623 = vpack.c.b16 %v455, %v449
    %v624 = vpack.c.b16 %v456, %v450
    %v625 = vpack.c.b16 %v457, %v451
    %v626 = vpack.c.b16 %v464, %v458
    %v627 = vpack.c.b16 %v465, %v459
    %v628 = vpack.c.b16 %v466, %v460
    %v629 = vpack.c.b16 %v467, %v461
    %v630 = vpack.c.b16 %v468, %v462
    %v631 = vpack.c.b16 %v469, %v463
    %v632 = vpack.c.b16 %v476, %v470
    %v633 = vpack.c.b16 %v477, %v471
    %v634 = vpack.c.b16 %v478, %v472
    %v635 = vpack.c.b16 %v479, %v473
    %v636 = vpack.c.b16 %v480, %v474
    %v637 = vpack.c.b16 %v481, %v475
    %v638 = vpack.c.b16 %v488, %v482
    %v639 = vpack.c.b16 %v489, %v483
    %v640 = vpack.c.b16 %v490, %v484
    %v641 = vpack.c.b16 %v491, %v485
    %v642 = vpack.c.b16 %v492, %v486
    %v643 = vpack.c.b16 %v493, %v487
    %v644 = vpack.c.b16 %v500, %v494
    %v645 = vpack.c.b16 %v501, %v495
    %v646 = vpack.c.b16 %v502, %v496
    %v647 = vpack.c.b16 %v503, %v497
    %v648 = vpack.c.b16 %v504, %v498
    %v649 = vpack.c.b16 %v505, %v499
    %v650 = vpack.c.b16 %v512, %v506
    %v651 = vpack.c.b16 %v513, %v507
    %v652 = vpack.c.b16 %v514, %v508
    %v653 = vpack.c.b16 %v515, %v509
    %v654 = vpack.c.b16 %v516, %v510
    %v655 = vpack.c.b16 %v517, %v511
    %v656 = vpack.c.b16 %v524, %v518
    %v657 = vpack.c.b16 %v525, %v519
    %v658 = vpack.c.b16 %v526, %v520
    %v659 = vpack.c.b16 %v527, %v521
    %v660 = vpack.c.b16 %v528, %v522
    %v661 = vpack.c.b16 %v529, %v523
    %v662 = vpack.c.b16 %v536, %v530
    %v663 = vpack.c.b16 %v537, %v531
    %v664 = vpack.c.b16 %v538, %v532
    %v665 = vpack.c.b16 %v539, %v533
    %v666 = vpack.c.b16 %v540, %v534
    %v667 = vpack.c.b16 %v541, %v535
    %v668 = vpack.c.b16 %v548, %v542
    %v669 = vpack.c.b16 %v549, %v543
    %v670 = vpack.c.b16 %v550, %v544
    %v671 = vpack.c.b16 %v551, %v545
    %v672 = vpack.c.b16 %v552, %v546
    %v673 = vpack.c.b16 %v553, %v547
    %v674 = vpack.c.b16 %v560, %v554
    %v675 = vpack.c.b16 %v561, %v555
    %v676 = vpack.c.b16 %v562, %v556
    %v677 = vpack.c.b16 %v563, %v557
    %v678 = vpack.c.b16 %v564, %v558
    %v679 = vpack.c.b16 %v565, %v559
    %v680 = vpack.c.b16 %v572, %v566
    %v681 = vpack.c.b16 %v573, %v567
    %v682 = vpack.c.b16 %v574, %v568
    %v683 = vpack.c.b16 %v575, %v569
    %v684 = vpack.c.b16 %v576, %v570
    %v685 = vpack.c.b16 %v577, %v571
    %v686 = vpack.c.b16 %v584, %v578
    %v687 = vpack.c.b16 %v585, %v579
    %v688 = vpack.c.b16 %v586, %v580
    %v689 = vpack.c.b16 %v587, %v581
    %v690 = vpack.c.b16 %v588, %v582
    %v691 = vpack.c.b16 %v589, %v583
    %v692 = vpack.c.b16 %v596, %v590
    %v693 = vpack.c.b16 %v597, %v591
    %v694 = vpack.c.b16 %v598, %v592
    %v695 = vpack.c.b16 %v599, %v593
    %v696 = vpack.c.b16 %v600, %v594
    %v697 = vpack.c.b16 %v601, %v595
    %794 = vmatprep.subr.bf16.mxu0 %v645
    %795 = vmatpush1.bf16.msra.mxu0 %v644
    %796 = vmatprep.subr.bf16.mxu0 %v639
    %797 = vmatpush1.bf16.msra.mxu0 %v638
    %798 = vmatprep.subr.bf16.mxu0 %v633
    %799 = vmatpush1.bf16.msra.mxu0 %v632
    %800 = vmatprep.subr.bf16.mxu0 %v627
    %801 = vmatpush1.bf16.msra.mxu0 %v626
    %802 = vmatprep.subr.bf16.mxu0 %v621
    %803 = vmatpush1.bf16.msra.mxu0 %v620
    %804 = vmatprep.subr.bf16.mxu0 %v615
    %805 = vmatpush1.bf16.msra.mxu0 %v614
    %806 = vmatprep.subr.bf16.mxu0 %v609
    %807 = vmatpush1.bf16.msra.mxu0 %v608
    %808 = vmatprep.subr.bf16.mxu0 %v603
    %809 = vmatpush1.bf16.msra.mxu0 %v602
    %810 = vmatprep.subr.bf16.mxu0 %v693
    %811 = vmatpush2.bf16.msra.mxu0 %v692
    %812 = vmatprep.subr.bf16.mxu0 %v687
    %813 = vmatpush2.bf16.msra.mxu0 %v686
    %814 = vmatprep.subr.bf16.mxu0 %v681
    %815 = vmatpush2.bf16.msra.mxu0 %v680
    %816 = vmatprep.subr.bf16.mxu0 %v675
    %817 = vmatpush2.bf16.msra.mxu0 %v674
    %818 = vmatprep.subr.bf16.mxu0 %v669
    %819 = vmatpush2.bf16.msra.mxu0 %v668
    %820 = vmatprep.subr.bf16.mxu0 %v663
    %821 = vmatpush2.bf16.msra.mxu0 %v662
    %822 = vmatprep.subr.bf16.mxu0 %v657
    %823 = vmatpush2.bf16.msra.mxu0 %v656
    %824 = vmatprep.subr.bf16.mxu0 %v651
    %825 = vmatpush2.bf16.msra.mxu0 %v650
    %826 = vmatprep.mubr.bf16.mxu0 %v290
    %827 = vmatmul.mubr.bf16.gmra.mxu0 %v258
    %v828 = vpop.f32.mrf.mxu0
    %v829 = vadd.f32 %v223, %v828
    %v830 = vpop.f32.mrf.mxu0
    %v831 = vadd.f32 %v227, %v830
    %v832 = vpop.f32.mrf.mxu0
    %v833 = vadd.f32 %v223, %v832
    %v834 = vpop.f32.mrf.mxu0
    %v835 = vadd.f32 %v227, %v834
    %836 = vmatprep.mubr.bf16.mxu0 %v291
    %837 = vmatmul.mubr.bf16.gmra.mxu0 %v259
    %v838 = vpop.f32.mrf.mxu0
    %v839 = vadd.f32 %v223, %v838
    %v840 = vpop.f32.mrf.mxu0
    %v841 = vadd.f32 %v227, %v840
    %v842 = vpop.f32.mrf.mxu0
    %v843 = vadd.f32 %v223, %v842
    %v844 = vpop.f32.mrf.mxu0
    %v845 = vadd.f32 %v227, %v844
    %846 = vmatprep.mubr.bf16.mxu0 %v292
    %847 = vmatmul.mubr.bf16.gmra.mxu0 %v260
    %v848 = vpop.f32.mrf.mxu0
    %v849 = vadd.f32 %v223, %v848
    %v850 = vpop.f32.mrf.mxu0
    %v851 = vadd.f32 %v227, %v850
    %v852 = vpop.f32.mrf.mxu0
    %v853 = vadd.f32 %v223, %v852
    %v854 = vpop.f32.mrf.mxu0
    %v855 = vadd.f32 %v227, %v854
    %856 = vmatprep.mubr.bf16.mxu0 %v293
    %857 = vmatmul.mubr.bf16.gmra.mxu0 %v261
    %v858 = vpop.f32.mrf.mxu0
    %v859 = vadd.f32 %v223, %v858
    %v860 = vpop.f32.mrf.mxu0
    %v861 = vadd.f32 %v227, %v860
    %v862 = vpop.f32.mrf.mxu0
    %v863 = vadd.f32 %v223, %v862
    %v864 = vpop.f32.mrf.mxu0
    %v865 = vadd.f32 %v227, %v864
    %866 = vmatprep.mubr.bf16.mxu0 %v294
    %867 = vmatmul.mubr.bf16.gmra.mxu0 %v262
    %v868 = vpop.f32.mrf.mxu0
    %v869 = vadd.f32 %v223, %v868
    %v870 = vpop.f32.mrf.mxu0
    %v871 = vadd.f32 %v227, %v870
    %v872 = vpop.f32.mrf.mxu0
    %v873 = vadd.f32 %v223, %v872
    %v874 = vpop.f32.mrf.mxu0
    %v875 = vadd.f32 %v227, %v874
    %876 = vmatprep.mubr.bf16.mxu0 %v295
    %877 = vmatmul.mubr.bf16.gmra.mxu0 %v263
    %v878 = vpop.f32.mrf.mxu0
    %v879 = vadd.f32 %v223, %v878
    %v880 = vpop.f32.mrf.mxu0
    %v881 = vadd.f32 %v227, %v880
    %v882 = vpop.f32.mrf.mxu0
    %v883 = vadd.f32 %v223, %v882
    %v884 = vpop.f32.mrf.mxu0
    %v885 = vadd.f32 %v227, %v884
    %886 = vmatprep.mubr.bf16.mxu0 %v296
    %887 = vmatmul.mubr.bf16.gmra.mxu0 %v264
    %v888 = vpop.f32.mrf.mxu0
    %v889 = vadd.f32 %v223, %v888
    %v890 = vpop.f32.mrf.mxu0
    %v891 = vadd.f32 %v227, %v890
    %v892 = vpop.f32.mrf.mxu0
    %v893 = vadd.f32 %v223, %v892
    %v894 = vpop.f32.mrf.mxu0
    %v895 = vadd.f32 %v227, %v894
    %896 = vmatprep.mubr.bf16.mxu0 %v297
    %897 = vmatmul.mubr.bf16.gmra.mxu0 %v265
    %v898 = vpop.f32.mrf.mxu0
    %v899 = vadd.f32 %v223, %v898
    %v900 = vpop.f32.mrf.mxu0
    %v901 = vadd.f32 %v227, %v900
    %v902 = vpop.f32.mrf.mxu0
    %v903 = vadd.f32 %v223, %v902
    %v904 = vpop.f32.mrf.mxu0
    %v905 = vadd.f32 %v227, %v904
    %906 = vmatprep.mubr.bf16.mxu0 %v306
    %907 = vmatmul.mubr.bf16.gmra.mxu0 %v274
    %v908 = vpop.f32.mrf.mxu0
    %v909 = vadd.f32 %v223, %v908
    %v910 = vpop.f32.mrf.mxu0
    %v911 = vadd.f32 %v227, %v910
    %v912 = vpop.f32.mrf.mxu0
    %v913 = vadd.f32 %v223, %v912
    %v914 = vpop.f32.mrf.mxu0
    %v915 = vadd.f32 %v227, %v914
    %916 = vmatprep.mubr.bf16.mxu0 %v307
    %917 = vmatmul.mubr.bf16.gmra.mxu0 %v275
    %v918 = vpop.f32.mrf.mxu0
    %v919 = vadd.f32 %v223, %v918
    %v920 = vpop.f32.mrf.mxu0
    %v921 = vadd.f32 %v227, %v920
    %v922 = vpop.f32.mrf.mxu0
    %v923 = vadd.f32 %v223, %v922
    %v924 = vpop.f32.mrf.mxu0
    %v925 = vadd.f32 %v227, %v924
    %926 = vmatprep.mubr.bf16.mxu0 %v308
    %927 = vmatmul.mubr.bf16.gmra.mxu0 %v276
    %v928 = vpop.f32.mrf.mxu0
    %v929 = vadd.f32 %v223, %v928
    %v930 = vpop.f32.mrf.mxu0
    %v931 = vadd.f32 %v227, %v930
    %v932 = vpop.f32.mrf.mxu0
    %v933 = vadd.f32 %v223, %v932
    %v934 = vpop.f32.mrf.mxu0
    %v935 = vadd.f32 %v227, %v934
    %936 = vmatprep.mubr.bf16.mxu0 %v309
    %937 = vmatmul.mubr.bf16.gmra.mxu0 %v277
    %v938 = vpop.f32.mrf.mxu0
    %v939 = vadd.f32 %v223, %v938
    %v940 = vpop.f32.mrf.mxu0
    %v941 = vadd.f32 %v227, %v940
    %v942 = vpop.f32.mrf.mxu0
    %v943 = vadd.f32 %v223, %v942
    %v944 = vpop.f32.mrf.mxu0
    %v945 = vadd.f32 %v227, %v944
    %946 = vmatprep.mubr.bf16.mxu0 %v310
    %947 = vmatmul.mubr.bf16.gmra.mxu0 %v278
    %v948 = vpop.f32.mrf.mxu0
    %v949 = vadd.f32 %v223, %v948
    %v950 = vpop.f32.mrf.mxu0
    %v951 = vadd.f32 %v227, %v950
    %v952 = vpop.f32.mrf.mxu0
    %v953 = vpop.f32.mrf.mxu0
    %954 = vdwg.mxu0
    %955 = vmatprep.subr.bf16.mxu0 %v647
    %956 = vmatpush1.bf16.msra.mxu0 %v646
    %957 = vmatprep.subr.bf16.mxu0 %v641
    %958 = vmatpush1.bf16.msra.mxu0 %v640
    %959 = vmatprep.subr.bf16.mxu0 %v635
    %960 = vmatpush1.bf16.msra.mxu0 %v634
    %961 = vmatprep.subr.bf16.mxu0 %v629
    %962 = vmatpush1.bf16.msra.mxu0 %v628
    %963 = vmatprep.subr.bf16.mxu0 %v623
    %964 = vmatpush1.bf16.msra.mxu0 %v622
    %965 = vmatprep.subr.bf16.mxu0 %v617
    %966 = vmatpush1.bf16.msra.mxu0 %v616
    %967 = vmatprep.subr.bf16.mxu0 %v611
    %968 = vmatpush1.bf16.msra.mxu0 %v610
    %969 = vmatprep.subr.bf16.mxu0 %v605
    %970 = vmatpush1.bf16.msra.mxu0 %v604
    %971 = vmatprep.subr.bf16.mxu0 %v695
    %972 = vmatpush2.bf16.msra.mxu0 %v694
    %973 = vmatprep.subr.bf16.mxu0 %v689
    %974 = vmatpush2.bf16.msra.mxu0 %v688
    %975 = vmatprep.subr.bf16.mxu0 %v683
    %976 = vmatpush2.bf16.msra.mxu0 %v682
    %977 = vmatprep.subr.bf16.mxu0 %v677
    %978 = vmatpush2.bf16.msra.mxu0 %v676
    %979 = vmatprep.subr.bf16.mxu0 %v671
    %980 = vmatpush2.bf16.msra.mxu0 %v670
    %981 = vmatprep.subr.bf16.mxu0 %v665
    %982 = vmatpush2.bf16.msra.mxu0 %v664
    %983 = vmatprep.subr.bf16.mxu0 %v659
    %984 = vmatpush2.bf16.msra.mxu0 %v658
    %985 = vmatprep.subr.bf16.mxu0 %v653
    %986 = vmatpush2.bf16.msra.mxu0 %v652
    %987 = vmatprep.mubr.bf16.mxu0 %v290
    %988 = vmatmul.mubr.bf16.gmra.mxu0 %v258
    %v989 = vpop.f32.mrf.mxu0
    %v990 = vadd.f32 %v231, %v989
    %v991 = vpop.f32.mrf.mxu0
    %v992 = vadd.f32 %v235, %v991
    %v993 = vpop.f32.mrf.mxu0
    %v994 = vadd.f32 %v231, %v993
    %v995 = vpop.f32.mrf.mxu0
    %v996 = vadd.f32 %v235, %v995
    %997 = vmatprep.mubr.bf16.mxu0 %v291
    %998 = vmatmul.mubr.bf16.gmra.mxu0 %v259
    %v999 = vpop.f32.mrf.mxu0
    %v1000 = vadd.f32 %v231, %v999
    %v1001 = vpop.f32.mrf.mxu0
    %v1002 = vadd.f32 %v235, %v1001
    %v1003 = vpop.f32.mrf.mxu0
    %v1004 = vadd.f32 %v231, %v1003
    %v1005 = vpop.f32.mrf.mxu0
    %v1006 = vadd.f32 %v235, %v1005
    %1007 = vmatprep.mubr.bf16.mxu0 %v292
    %1008 = vmatmul.mubr.bf16.gmra.mxu0 %v260
    %v1009 = vpop.f32.mrf.mxu0
    %v1010 = vadd.f32 %v231, %v1009
    %v1011 = vpop.f32.mrf.mxu0
    %v1012 = vadd.f32 %v235, %v1011
    %v1013 = vpop.f32.mrf.mxu0
    %v1014 = vadd.f32 %v231, %v1013
    %v1015 = vpop.f32.mrf.mxu0
    %v1016 = vadd.f32 %v235, %v1015
    %1017 = vmatprep.mubr.bf16.mxu0 %v293
    %1018 = vmatmul.mubr.bf16.gmra.mxu0 %v261
    %v1019 = vpop.f32.mrf.mxu0
    %v1020 = vadd.f32 %v231, %v1019
    %v1021 = vpop.f32.mrf.mxu0
    %v1022 = vadd.f32 %v235, %v1021
    %v1023 = vpop.f32.mrf.mxu0
    %v1024 = vadd.f32 %v231, %v1023
    %v1025 = vpop.f32.mrf.mxu0
    %v1026 = vadd.f32 %v235, %v1025
    %1027 = vmatprep.mubr.bf16.mxu0 %v294
    %1028 = vmatmul.mubr.bf16.gmra.mxu0 %v262
    %v1029 = vpop.f32.mrf.mxu0
    %v1030 = vadd.f32 %v231, %v1029
    %v1031 = vpop.f32.mrf.mxu0
    %v1032 = vadd.f32 %v235, %v1031
    %v1033 = vpop.f32.mrf.mxu0
    %v1034 = vadd.f32 %v231, %v1033
    %v1035 = vpop.f32.mrf.mxu0
    %v1036 = vadd.f32 %v235, %v1035
    %1037 = vmatprep.mubr.bf16.mxu0 %v295
    %1038 = vmatmul.mubr.bf16.gmra.mxu0 %v263
    %v1039 = vpop.f32.mrf.mxu0
    %v1040 = vadd.f32 %v231, %v1039
    %v1041 = vpop.f32.mrf.mxu0
    %v1042 = vadd.f32 %v235, %v1041
    %v1043 = vpop.f32.mrf.mxu0
    %v1044 = vadd.f32 %v231, %v1043
    %v1045 = vpop.f32.mrf.mxu0
    %v1046 = vadd.f32 %v235, %v1045
    %1047 = vmatprep.mubr.bf16.mxu0 %v296
    %1048 = vmatmul.mubr.bf16.gmra.mxu0 %v264
    %v1049 = vpop.f32.mrf.mxu0
    %v1050 = vadd.f32 %v231, %v1049
    %v1051 = vpop.f32.mrf.mxu0
    %v1052 = vadd.f32 %v235, %v1051
    %v1053 = vpop.f32.mrf.mxu0
    %v1054 = vadd.f32 %v231, %v1053
    %v1055 = vpop.f32.mrf.mxu0
    %v1056 = vadd.f32 %v235, %v1055
    %1057 = vmatprep.mubr.bf16.mxu0 %v297
    %1058 = vmatmul.mubr.bf16.gmra.mxu0 %v265
    %v1059 = vpop.f32.mrf.mxu0
    %v1060 = vadd.f32 %v231, %v1059
    %v1061 = vpop.f32.mrf.mxu0
    %v1062 = vadd.f32 %v235, %v1061
    %v1063 = vpop.f32.mrf.mxu0
    %v1064 = vadd.f32 %v231, %v1063
    %v1065 = vpop.f32.mrf.mxu0
    %v1066 = vadd.f32 %v235, %v1065
    %1067 = vmatprep.mubr.bf16.mxu0 %v306
    %1068 = vmatmul.mubr.bf16.gmra.mxu0 %v274
    %v1069 = vpop.f32.mrf.mxu0
    %v1070 = vadd.f32 %v231, %v1069
    %v1071 = vpop.f32.mrf.mxu0
    %v1072 = vadd.f32 %v235, %v1071
    %v1073 = vpop.f32.mrf.mxu0
    %v1074 = vadd.f32 %v231, %v1073
    %v1075 = vpop.f32.mrf.mxu0
    %v1076 = vadd.f32 %v235, %v1075
    %1077 = vmatprep.mubr.bf16.mxu0 %v307
    %1078 = vmatmul.mubr.bf16.gmra.mxu0 %v275
    %v1079 = vpop.f32.mrf.mxu0
    %v1080 = vadd.f32 %v231, %v1079
    %v1081 = vpop.f32.mrf.mxu0
    %v1082 = vadd.f32 %v235, %v1081
    %v1083 = vpop.f32.mrf.mxu0
    %v1084 = vadd.f32 %v231, %v1083
    %v1085 = vpop.f32.mrf.mxu0
    %v1086 = vadd.f32 %v235, %v1085
    %1087 = vmatprep.mubr.bf16.mxu0 %v308
    %1088 = vmatmul.mubr.bf16.gmra.mxu0 %v276
    %v1089 = vpop.f32.mrf.mxu0
    %v1090 = vadd.f32 %v231, %v1089
    %v1091 = vpop.f32.mrf.mxu0
    %v1092 = vadd.f32 %v235, %v1091
    %v1093 = vpop.f32.mrf.mxu0
    %v1094 = vadd.f32 %v231, %v1093
    %v1095 = vpop.f32.mrf.mxu0
    %v1096 = vadd.f32 %v235, %v1095
    %1097 = vmatprep.mubr.bf16.mxu0 %v309
    %1098 = vmatmul.mubr.bf16.gmra.mxu0 %v277
    %v1099 = vpop.f32.mrf.mxu0
    %v1100 = vadd.f32 %v231, %v1099
    %v1101 = vpop.f32.mrf.mxu0
    %v1102 = vadd.f32 %v235, %v1101
    %v1103 = vpop.f32.mrf.mxu0
    %v1104 = vadd.f32 %v231, %v1103
    %v1105 = vpop.f32.mrf.mxu0
    %v1106 = vadd.f32 %v235, %v1105
    %1107 = vmatprep.mubr.bf16.mxu0 %v310
    %1108 = vmatmul.mubr.bf16.gmra.mxu0 %v278
    %v1109 = vpop.f32.mrf.mxu0
    %v1110 = vadd.f32 %v231, %v1109
    %v1111 = vpop.f32.mrf.mxu0
    %v1112 = vadd.f32 %v235, %v1111
    %v1113 = vpop.f32.mrf.mxu0
    %v1114 = vpop.f32.mrf.mxu0
    %1115 = vdwg.mxu0
    %1116 = vmatprep.subr.bf16.mxu0 %v649
    %1117 = vmatpush1.bf16.msra.mxu0 %v648
    %1118 = vmatprep.subr.bf16.mxu0 %v643
    %1119 = vmatpush1.bf16.msra.mxu0 %v642
    %1120 = vmatprep.subr.bf16.mxu0 %v637
    %1121 = vmatpush1.bf16.msra.mxu0 %v636
    %1122 = vmatprep.subr.bf16.mxu0 %v631
    %1123 = vmatpush1.bf16.msra.mxu0 %v630
    %1124 = vmatprep.subr.bf16.mxu0 %v625
    %1125 = vmatpush1.bf16.msra.mxu0 %v624
    %1126 = vmatprep.subr.bf16.mxu0 %v619
    %1127 = vmatpush1.bf16.msra.mxu0 %v618
    %1128 = vmatprep.subr.bf16.mxu0 %v613
    %1129 = vmatpush1.bf16.msra.mxu0 %v612
    %1130 = vmatprep.subr.bf16.mxu0 %v607
    %1131 = vmatpush1.bf16.msra.mxu0 %v606
    %1132 = vmatprep.subr.bf16.mxu0 %v697
    %1133 = vmatpush2.bf16.msra.mxu0 %v696
    %1134 = vmatprep.subr.bf16.mxu0 %v691
    %1135 = vmatpush2.bf16.msra.mxu0 %v690
    %1136 = vmatprep.subr.bf16.mxu0 %v685
    %1137 = vmatpush2.bf16.msra.mxu0 %v684
    %1138 = vmatprep.subr.bf16.mxu0 %v679
    %1139 = vmatpush2.bf16.msra.mxu0 %v678
    %1140 = vmatprep.subr.bf16.mxu0 %v673
    %1141 = vmatpush2.bf16.msra.mxu0 %v672
    %1142 = vmatprep.subr.bf16.mxu0 %v667
    %1143 = vmatpush2.bf16.msra.mxu0 %v666
    %1144 = vmatprep.subr.bf16.mxu0 %v661
    %1145 = vmatpush2.bf16.msra.mxu0 %v660
    %1146 = vmatprep.subr.bf16.mxu0 %v655
    %1147 = vmatpush2.bf16.msra.mxu0 %v654
    %1148 = vmatprep.mubr.bf16.mxu0 %v290
    %1149 = vmatmul.mubr.bf16.gmra.mxu0 %v258
    %v1150 = vpop.f32.mrf.mxu0
    %v1151 = vadd.f32 %v239, %v1150
    %v1152 = vpop.f32.mrf.mxu0
    %v1153 = vadd.f32 %v243, %v1152
    %v1154 = vpop.f32.mrf.mxu0
    %v1155 = vadd.f32 %v239, %v1154
    %v1156 = vpop.f32.mrf.mxu0
    %v1157 = vadd.f32 %v243, %v1156
    %1158 = vmatprep.mubr.bf16.mxu0 %v291
    %1159 = vmatmul.mubr.bf16.gmra.mxu0 %v259
    %v1160 = vpop.f32.mrf.mxu0
    %v1161 = vadd.f32 %v239, %v1160
    %v1162 = vpop.f32.mrf.mxu0
    %v1163 = vadd.f32 %v243, %v1162
    %v1164 = vpop.f32.mrf.mxu0
    %v1165 = vadd.f32 %v239, %v1164
    %v1166 = vpop.f32.mrf.mxu0
    %v1167 = vadd.f32 %v243, %v1166
    %1168 = vmatprep.mubr.bf16.mxu0 %v292
    %1169 = vmatmul.mubr.bf16.gmra.mxu0 %v260
    %v1170 = vpop.f32.mrf.mxu0
    %v1171 = vadd.f32 %v239, %v1170
    %v1172 = vpop.f32.mrf.mxu0
    %v1173 = vadd.f32 %v243, %v1172
    %v1174 = vpop.f32.mrf.mxu0
    %v1175 = vadd.f32 %v239, %v1174
    %v1176 = vpop.f32.mrf.mxu0
    %v1177 = vadd.f32 %v243, %v1176
    %1178 = vmatprep.mubr.bf16.mxu0 %v293
    %1179 = vmatmul.mubr.bf16.gmra.mxu0 %v261
    %v1180 = vpop.f32.mrf.mxu0
    %v1181 = vadd.f32 %v239, %v1180
    %v1182 = vpop.f32.mrf.mxu0
    %v1183 = vadd.f32 %v243, %v1182
    %v1184 = vpop.f32.mrf.mxu0
    %v1185 = vadd.f32 %v239, %v1184
    %v1186 = vpop.f32.mrf.mxu0
    %v1187 = vadd.f32 %v243, %v1186
    %1188 = vmatprep.mubr.bf16.mxu0 %v294
    %1189 = vmatmul.mubr.bf16.gmra.mxu0 %v262
    %v1190 = vpop.f32.mrf.mxu0
    %v1191 = vadd.f32 %v239, %v1190
    %v1192 = vpop.f32.mrf.mxu0
    %v1193 = vadd.f32 %v243, %v1192
    %v1194 = vpop.f32.mrf.mxu0
    %v1195 = vadd.f32 %v239, %v1194
    %v1196 = vpop.f32.mrf.mxu0
    %v1197 = vadd.f32 %v243, %v1196
    %1198 = vmatprep.mubr.bf16.mxu0 %v295
    %1199 = vmatmul.mubr.bf16.gmra.mxu0 %v263
    %v1200 = vpop.f32.mrf.mxu0
    %v1201 = vadd.f32 %v239, %v1200
    %v1202 = vpop.f32.mrf.mxu0
    %v1203 = vadd.f32 %v243, %v1202
    %v1204 = vpop.f32.mrf.mxu0
    %v1205 = vadd.f32 %v239, %v1204
    %v1206 = vpop.f32.mrf.mxu0
    %v1207 = vadd.f32 %v243, %v1206
    %1208 = vmatprep.mubr.bf16.mxu0 %v296
    %1209 = vmatmul.mubr.bf16.gmra.mxu0 %v264
    %v1210 = vpop.f32.mrf.mxu0
    %v1211 = vadd.f32 %v239, %v1210
    %v1212 = vpop.f32.mrf.mxu0
    %v1213 = vadd.f32 %v243, %v1212
    %v1214 = vpop.f32.mrf.mxu0
    %v1215 = vadd.f32 %v239, %v1214
    %v1216 = vpop.f32.mrf.mxu0
    %v1217 = vadd.f32 %v243, %v1216
    %1218 = vmatprep.mubr.bf16.mxu0 %v297
    %1219 = vmatmul.mubr.bf16.gmra.mxu0 %v265
    %v1220 = vpop.f32.mrf.mxu0
    %v1221 = vadd.f32 %v239, %v1220
    %v1222 = vpop.f32.mrf.mxu0
    %v1223 = vadd.f32 %v243, %v1222
    %v1224 = vpop.f32.mrf.mxu0
    %v1225 = vadd.f32 %v239, %v1224
    %v1226 = vpop.f32.mrf.mxu0
    %v1227 = vadd.f32 %v243, %v1226
    %1228 = vmatprep.mubr.bf16.mxu0 %v306
    %1229 = vmatmul.mubr.bf16.gmra.mxu0 %v274
    %v1230 = vpop.f32.mrf.mxu0
    %v1231 = vadd.f32 %v239, %v1230
    %v1232 = vpop.f32.mrf.mxu0
    %v1233 = vadd.f32 %v243, %v1232
    %v1234 = vpop.f32.mrf.mxu0
    %v1235 = vadd.f32 %v239, %v1234
    %v1236 = vpop.f32.mrf.mxu0
    %v1237 = vadd.f32 %v243, %v1236
    %1238 = vmatprep.mubr.bf16.mxu0 %v307
    %1239 = vmatmul.mubr.bf16.gmra.mxu0 %v275
    %v1240 = vpop.f32.mrf.mxu0
    %v1241 = vadd.f32 %v239, %v1240
    %v1242 = vpop.f32.mrf.mxu0
    %v1243 = vadd.f32 %v243, %v1242
    %v1244 = vpop.f32.mrf.mxu0
    %v1245 = vadd.f32 %v239, %v1244
    %v1246 = vpop.f32.mrf.mxu0
    %v1247 = vadd.f32 %v243, %v1246
    %1248 = vmatprep.mubr.bf16.mxu0 %v308
    %1249 = vmatmul.mubr.bf16.gmra.mxu0 %v276
    %v1250 = vpop.f32.mrf.mxu0
    %v1251 = vadd.f32 %v239, %v1250
    %v1252 = vpop.f32.mrf.mxu0
    %v1253 = vadd.f32 %v243, %v1252
    %v1254 = vpop.f32.mrf.mxu0
    %v1255 = vadd.f32 %v239, %v1254
    %v1256 = vpop.f32.mrf.mxu0
    %v1257 = vadd.f32 %v243, %v1256
    %1258 = vmatprep.mubr.bf16.mxu0 %v309
    %1259 = vmatmul.mubr.bf16.gmra.mxu0 %v277
    %v1260 = vpop.f32.mrf.mxu0
    %v1261 = vadd.f32 %v239, %v1260
    %v1262 = vpop.f32.mrf.mxu0
    %v1263 = vadd.f32 %v243, %v1262
    %v1264 = vpop.f32.mrf.mxu0
    %v1265 = vadd.f32 %v239, %v1264
    %v1266 = vpop.f32.mrf.mxu0
    %v1267 = vadd.f32 %v243, %v1266
    %1268 = vmatprep.mubr.bf16.mxu0 %v310
    %1269 = vmatmul.mubr.bf16.gmra.mxu0 %v278
    %v1270 = vpop.f32.mrf.mxu0
    %v1271 = vadd.f32 %v239, %v1270
    %v1272 = vpop.f32.mrf.mxu0
    %v1273 = vadd.f32 %v243, %v1272
    %v1274 = vpop.f32.mrf.mxu0
    %v1275 = vpop.f32.mrf.mxu0
    %1276 = vdwg.mxu0
    %1277 = vst [vmem:[%s3] sm:$0xff] %v829
    %1278 = vst [vmem:[%s3 + $0x8] sm:$0xff] %v831
    %1279 = vst [vmem:[%s3 + $0x10] sm:$0xff] %v990
    %1280 = vst [vmem:[%s3 + $0x18] sm:$0xff] %v992
    %1281 = vst [vmem:[%s3 + $0x20] sm:$0xff] %v1151
    %1282 = vst [vmem:[%s3 + $0x28] sm:$0xff] %v1153
    %1283 = vst [vmem:[%s3 + $0x30] sm:$0xff] %v833
    %1284 = vst [vmem:[%s3 + $0x38] sm:$0xff] %v835
    %1285 = vst [vmem:[%s3 + $0x40] sm:$0xff] %v994
    %1286 = vst [vmem:[%s3 + $0x48] sm:$0xff] %v996
    %1287 = vst [vmem:[%s3 + $0x50] sm:$0xff] %v1155
    %1288 = vst [vmem:[%s3 + $0x58] sm:$0xff] %v1157
    %1289 = vst [vmem:[%s3 + $0x60] sm:$0xff] %v839
    %1290 = vst [vmem:[%s3 + $0x68] sm:$0xff] %v841
    %1291 = vst [vmem:[%s3 + $0x70] sm:$0xff] %v1000
    %1292 = vst [vmem:[%s3 + $0x78] sm:$0xff] %v1002
    %1293 = vst [vmem:[%s3 + $0x80] sm:$0xff] %v1161
    %1294 = vst [vmem:[%s3 + $0x88] sm:$0xff] %v1163
    %1295 = vst [vmem:[%s3 + $0x90] sm:$0xff] %v843
    %1296 = vst [vmem:[%s3 + $0x98] sm:$0xff] %v845
    %1297 = vst [vmem:[%s3 + $0xa0] sm:$0xff] %v1004
    %1298 = vst [vmem:[%s3 + $0xa8] sm:$0xff] %v1006
    %1299 = vst [vmem:[%s3 + $0xb0] sm:$0xff] %v1165
    %1300 = vst [vmem:[%s3 + $0xb8] sm:$0xff] %v1167
    %1301 = vst [vmem:[%s3 + $0xc0] sm:$0xff] %v849
    %1302 = vst [vmem:[%s3 + $0xc8] sm:$0xff] %v851
    %1303 = vst [vmem:[%s3 + $0xd0] sm:$0xff] %v1010
    %1304 = vst [vmem:[%s3 + $0xd8] sm:$0xff] %v1012
    %1305 = vst [vmem:[%s3 + $0xe0] sm:$0xff] %v1171
    %1306 = vst [vmem:[%s3 + $0xe8] sm:$0xff] %v1173
    %1307 = vst [vmem:[%s3 + $0xf0] sm:$0xff] %v853
    %1308 = vst [vmem:[%s3 + $0xf8] sm:$0xff] %v855
    %1309 = vst [vmem:[%s3 + $0x100] sm:$0xff] %v1014
    %1310 = vst [vmem:[%s3 + $0x108] sm:$0xff] %v1016
    %1311 = vst [vmem:[%s3 + $0x110] sm:$0xff] %v1175
    %1312 = vst [vmem:[%s3 + $0x118] sm:$0xff] %v1177
    %1313 = vst [vmem:[%s3 + $0x120] sm:$0xff] %v859
    %1314 = vst [vmem:[%s3 + $0x128] sm:$0xff] %v861
    %1315 = vst [vmem:[%s3 + $0x130] sm:$0xff] %v1020
    %1316 = vst [vmem:[%s3 + $0x138] sm:$0xff] %v1022
    %1317 = vst [vmem:[%s3 + $0x140] sm:$0xff] %v1181
    %1318 = vst [vmem:[%s3 + $0x148] sm:$0xff] %v1183
    %1319 = vst [vmem:[%s3 + $0x150] sm:$0xff] %v863
    %1320 = vst [vmem:[%s3 + $0x158] sm:$0xff] %v865
    %1321 = vst [vmem:[%s3 + $0x160] sm:$0xff] %v1024
    %1322 = vst [vmem:[%s3 + $0x168] sm:$0xff] %v1026
    %1323 = vst [vmem:[%s3 + $0x170] sm:$0xff] %v1185
    %1324 = vst [vmem:[%s3 + $0x178] sm:$0xff] %v1187
    %1325 = vst [vmem:[%s3 + $0x180] sm:$0xff] %v869
    %1326 = vst [vmem:[%s3 + $0x188] sm:$0xff] %v871
    %1327 = vst [vmem:[%s3 + $0x190] sm:$0xff] %v1030
    %1328 = vst [vmem:[%s3 + $0x198] sm:$0xff] %v1032
    %1329 = vst [vmem:[%s3 + $0x1a0] sm:$0xff] %v1191
    %1330 = vst [vmem:[%s3 + $0x1a8] sm:$0xff] %v1193
    %1331 = vst [vmem:[%s3 + $0x1b0] sm:$0xff] %v873
    %1332 = vst [vmem:[%s3 + $0x1b8] sm:$0xff] %v875
    %1333 = vst [vmem:[%s3 + $0x1c0] sm:$0xff] %v1034
    %1334 = vst [vmem:[%s3 + $0x1c8] sm:$0xff] %v1036
    %1335 = vst [vmem:[%s3 + $0x1d0] sm:$0xff] %v1195
    %1336 = vst [vmem:[%s3 + $0x1d8] sm:$0xff] %v1197
    %1337 = vst [vmem:[%s3 + $0x1e0] sm:$0xff] %v879
    %1338 = vst [vmem:[%s3 + $0x1e8] sm:$0xff] %v881
    %1339 = vst [vmem:[%s3 + $0x1f0] sm:$0xff] %v1040
    %1340 = vst [vmem:[%s3 + $0x1f8] sm:$0xff] %v1042
    %1341 = vst [vmem:[%s3 + $0x200] sm:$0xff] %v1201
    %1342 = vst [vmem:[%s3 + $0x208] sm:$0xff] %v1203
    %1343 = vst [vmem:[%s3 + $0x210] sm:$0xff] %v883
    %1344 = vst [vmem:[%s3 + $0x218] sm:$0xff] %v885
    %1345 = vst [vmem:[%s3 + $0x220] sm:$0xff] %v1044
    %1346 = vst [vmem:[%s3 + $0x228] sm:$0xff] %v1046
    %1347 = vst [vmem:[%s3 + $0x230] sm:$0xff] %v1205
    %1348 = vst [vmem:[%s3 + $0x238] sm:$0xff] %v1207
    %1349 = vst [vmem:[%s3 + $0x240] sm:$0xff] %v889
    %1350 = vst [vmem:[%s3 + $0x248] sm:$0xff] %v891
    %1351 = vst [vmem:[%s3 + $0x250] sm:$0xff] %v1050
    %1352 = vst [vmem:[%s3 + $0x258] sm:$0xff] %v1052
    %1353 = vst [vmem:[%s3 + $0x260] sm:$0xff] %v1211
    %1354 = vst [vmem:[%s3 + $0x268] sm:$0xff] %v1213
    %1355 = vst [vmem:[%s3 + $0x270] sm:$0xff] %v893
    %1356 = vst [vmem:[%s3 + $0x278] sm:$0xff] %v895
    %1357 = vst [vmem:[%s3 + $0x280] sm:$0xff] %v1054
    %1358 = vst [vmem:[%s3 + $0x288] sm:$0xff] %v1056
    %1359 = vst [vmem:[%s3 + $0x290] sm:$0xff] %v1215
    %1360 = vst [vmem:[%s3 + $0x298] sm:$0xff] %v1217
    %1361 = vst [vmem:[%s3 + $0x2a0] sm:$0xff] %v899
    %1362 = vst [vmem:[%s3 + $0x2a8] sm:$0xff] %v901
    %1363 = vst [vmem:[%s3 + $0x2b0] sm:$0xff] %v1060
    %1364 = vst [vmem:[%s3 + $0x2b8] sm:$0xff] %v1062
    %1365 = vst [vmem:[%s3 + $0x2c0] sm:$0xff] %v1221
    %1366 = vst [vmem:[%s3 + $0x2c8] sm:$0xff] %v1223
    %1367 = vst [vmem:[%s3 + $0x2d0] sm:$0xff] %v903
    %1368 = vst [vmem:[%s3 + $0x2d8] sm:$0xff] %v905
    %1369 = vst [vmem:[%s3 + $0x2e0] sm:$0xff] %v1064
    %1370 = vst [vmem:[%s3 + $0x2e8] sm:$0xff] %v1066
    %1371 = vst [vmem:[%s3 + $0x2f0] sm:$0xff] %v1225
    %1372 = vst [vmem:[%s3 + $0x2f8] sm:$0xff] %v1227
    %1373 = vst [vmem:[%s3 + $0x300] sm:$0xff] %v909
    %1374 = vst [vmem:[%s3 + $0x308] sm:$0xff] %v911
    %1375 = vst [vmem:[%s3 + $0x310] sm:$0xff] %v1070
    %1376 = vst [vmem:[%s3 + $0x318] sm:$0xff] %v1072
    %1377 = vst [vmem:[%s3 + $0x320] sm:$0xff] %v1231
    %1378 = vst [vmem:[%s3 + $0x328] sm:$0xff] %v1233
    %1379 = vst [vmem:[%s3 + $0x330] sm:$0xff] %v913
    %1380 = vst [vmem:[%s3 + $0x338] sm:$0xff] %v915
    %1381 = vst [vmem:[%s3 + $0x340] sm:$0xff] %v1074
    %1382 = vst [vmem:[%s3 + $0x348] sm:$0xff] %v1076
    %1383 = vst [vmem:[%s3 + $0x350] sm:$0xff] %v1235
    %1384 = vst [vmem:[%s3 + $0x358] sm:$0xff] %v1237
    %1385 = vst [vmem:[%s3 + $0x360] sm:$0xff] %v919
    %1386 = vst [vmem:[%s3 + $0x368] sm:$0xff] %v921
    %1387 = vst [vmem:[%s3 + $0x370] sm:$0xff] %v1080
    %1388 = vst [vmem:[%s3 + $0x378] sm:$0xff] %v1082
    %1389 = vst [vmem:[%s3 + $0x380] sm:$0xff] %v1241
    %1390 = vst [vmem:[%s3 + $0x388] sm:$0xff] %v1243
    %1391 = vst [vmem:[%s3 + $0x390] sm:$0xff] %v923
    %1392 = vst [vmem:[%s3 + $0x398] sm:$0xff] %v925
    %1393 = vst [vmem:[%s3 + $0x3a0] sm:$0xff] %v1084
    %1394 = vst [vmem:[%s3 + $0x3a8] sm:$0xff] %v1086
    %1395 = vst [vmem:[%s3 + $0x3b0] sm:$0xff] %v1245
    %1396 = vst [vmem:[%s3 + $0x3b8] sm:$0xff] %v1247
    %1397 = vst [vmem:[%s3 + $0x3c0] sm:$0xff] %v929
    %1398 = vst [vmem:[%s3 + $0x3c8] sm:$0xff] %v931
    %1399 = vst [vmem:[%s3 + $0x3d0] sm:$0xff] %v1090
    %1400 = vst [vmem:[%s3 + $0x3d8] sm:$0xff] %v1092
    %1401 = vst [vmem:[%s3 + $0x3e0] sm:$0xff] %v1251
    %1402 = vst [vmem:[%s3 + $0x3e8] sm:$0xff] %v1253
    %1403 = vst [vmem:[%s3 + $0x3f0] sm:$0xff] %v933
    %1404 = vst [vmem:[%s3 + $0x3f8] sm:$0xff] %v935
    %1405 = vst [vmem:[%s3 + $0x400] sm:$0xff] %v1094
    %1406 = vst [vmem:[%s3 + $0x408] sm:$0xff] %v1096
    %1407 = vst [vmem:[%s3 + $0x410] sm:$0xff] %v1255
    %1408 = vst [vmem:[%s3 + $0x418] sm:$0xff] %v1257
    %1409 = vst [vmem:[%s3 + $0x420] sm:$0xff] %v939
    %1410 = vst [vmem:[%s3 + $0x428] sm:$0xff] %v941
    %1411 = vst [vmem:[%s3 + $0x430] sm:$0xff] %v1100
    %1412 = vst [vmem:[%s3 + $0x438] sm:$0xff] %v1102
    %1413 = vst [vmem:[%s3 + $0x440] sm:$0xff] %v1261
    %1414 = vst [vmem:[%s3 + $0x448] sm:$0xff] %v1263
    %1415 = vst [vmem:[%s3 + $0x450] sm:$0xff] %v943
    %1416 = vst [vmem:[%s3 + $0x458] sm:$0xff] %v945
    %1417 = vst [vmem:[%s3 + $0x460] sm:$0xff] %v1104
    %1418 = vst [vmem:[%s3 + $0x468] sm:$0xff] %v1106
    %1419 = vst [vmem:[%s3 + $0x470] sm:$0xff] %v1265
    %1420 = vst [vmem:[%s3 + $0x478] sm:$0xff] %v1267
    %1421 = vst [vmem:[%s3 + $0x480] sm:$0xf] %v949
    %1422 = vst [vmem:[%s3 + $0x488] sm:$0xf] %v951
    %1423 = vst [vmem:[%s3 + $0x490] sm:$0xf] %v1110
    %1424 = vst [vmem:[%s3 + $0x498] sm:$0xf] %v1112
    %1425 = vst [vmem:[%s3 + $0x4a0] sm:$0xf] %v1271
    %1426 = vst [vmem:[%s3 + $0x4a8] sm:$0xf] %v1273
    %s1427 = scalar_lea.vmem %s0, 512
    %v1428 = vld [vmem:[%s1427] sm:$0xff]
    %v1429 = vld [vmem:[%s1427 + $0x8] sm:$0xff]
    %v1430 = vld [vmem:[%s1427 + $0x10] sm:$0xff]
    %v1431 = vld [vmem:[%s1427 + $0x18] sm:$0xff]
    %v1432 = vld [vmem:[%s1427 + $0x20] sm:$0xff]
    %v1433 = vld [vmem:[%s1427 + $0x28] sm:$0xff]
    %v1434 = vld [vmem:[%s1427 + $0x30] sm:$0xff]
    %v1435 = vld [vmem:[%s1427 + $0x38] sm:$0xff]
    %v1436 = vld [vmem:[%s1427 + $0x40] sm:$0xff]
    %v1437 = vld [vmem:[%s1427 + $0x48] sm:$0xff]
    %v1438 = vld [vmem:[%s1427 + $0x50] sm:$0xff]
    %v1439 = vld [vmem:[%s1427 + $0x58] sm:$0xff]
    %v1440 = vld [vmem:[%s1427 + $0x60] sm:$0xff]
    %v1441 = vld [vmem:[%s1427 + $0x68] sm:$0xff]
    %v1442 = vld [vmem:[%s1427 + $0x70] sm:$0xff]
    %v1443 = vld [vmem:[%s1427 + $0x78] sm:$0xff]
    %v1444 = vld [vmem:[%s1427 + $0x80] sm:$0xff]
    %v1445 = vld [vmem:[%s1427 + $0x88] sm:$0xff]
    %v1446 = vld [vmem:[%s1427 + $0x90] sm:$0xff]
    %v1447 = vld [vmem:[%s1427 + $0x98] sm:$0xff]
    %v1448 = vld [vmem:[%s1427 + $0xa0] sm:$0xff]
    %v1449 = vld [vmem:[%s1427 + $0xa8] sm:$0xff]
    %v1450 = vld [vmem:[%s1427 + $0xb0] sm:$0xff]
    %v1451 = vld [vmem:[%s1427 + $0xb8] sm:$0xff]
    %v1452 = vld [vmem:[%s1427 + $0xc0] sm:$0xff]
    %v1453 = vld [vmem:[%s1427 + $0xc8] sm:$0xff]
    %v1454 = vld [vmem:[%s1427 + $0xd0] sm:$0xff]
    %v1455 = vld [vmem:[%s1427 + $0xd8] sm:$0xff]
    %v1456 = vld [vmem:[%s1427 + $0xe0] sm:$0xff]
    %v1457 = vld [vmem:[%s1427 + $0xe8] sm:$0xff]
    %v1458 = vld [vmem:[%s1427 + $0xf0] sm:$0xff]
    %v1459 = vld [vmem:[%s1427 + $0xf8] sm:$0xff]
    %v1460 = vld [vmem:[%s1427 + $0x100] sm:$0xff]
    %v1461 = vld [vmem:[%s1427 + $0x108] sm:$0xff]
    %v1462 = vld [vmem:[%s1427 + $0x110] sm:$0xff]
    %v1463 = vld [vmem:[%s1427 + $0x118] sm:$0xff]
    %v1464 = vld [vmem:[%s1427 + $0x120] sm:$0xff]
    %v1465 = vld [vmem:[%s1427 + $0x128] sm:$0xff]
    %v1466 = vld [vmem:[%s1427 + $0x130] sm:$0xff]
    %v1467 = vld [vmem:[%s1427 + $0x138] sm:$0xff]
    %v1468 = vld [vmem:[%s1427 + $0x140] sm:$0xff]
    %v1469 = vld [vmem:[%s1427 + $0x148] sm:$0xff]
    %v1470 = vld [vmem:[%s1427 + $0x150] sm:$0xff]
    %v1471 = vld [vmem:[%s1427 + $0x158] sm:$0xff]
    %v1472 = vld [vmem:[%s1427 + $0x160] sm:$0xff]
    %v1473 = vld [vmem:[%s1427 + $0x168] sm:$0xff]
    %v1474 = vld [vmem:[%s1427 + $0x170] sm:$0xff]
    %v1475 = vld [vmem:[%s1427 + $0x178] sm:$0xff]
    %v1476 = vld [vmem:[%s1427 + $0x180] sm:$0xff]
    %v1477 = vld [vmem:[%s1427 + $0x188] sm:$0xff]
    %v1478 = vld [vmem:[%s1427 + $0x190] sm:$0xff]
    %v1479 = vld [vmem:[%s1427 + $0x198] sm:$0xff]
    %v1480 = vld [vmem:[%s1427 + $0x1a0] sm:$0xff]
    %v1481 = vld [vmem:[%s1427 + $0x1a8] sm:$0xff]
    %v1482 = vld [vmem:[%s1427 + $0x1b0] sm:$0xff]
    %v1483 = vld [vmem:[%s1427 + $0x1b8] sm:$0xff]
    %v1484 = vld [vmem:[%s1427 + $0x1c0] sm:$0xff]
    %v1485 = vld [vmem:[%s1427 + $0x1c8] sm:$0xff]
    %v1486 = vld [vmem:[%s1427 + $0x1d0] sm:$0xff]
    %v1487 = vld [vmem:[%s1427 + $0x1d8] sm:$0xff]
    %v1488 = vld [vmem:[%s1427 + $0x1e0] sm:$0xff]
    %v1489 = vld [vmem:[%s1427 + $0x1e8] sm:$0xff]
    %v1490 = vld [vmem:[%s1427 + $0x1f0] sm:$0xff]
    %v1491 = vld [vmem:[%s1427 + $0x1f8] sm:$0xff]
    %v1492 = vpack.c.bf16 %v1430, %v1428
    %v1493 = vpack.c.bf16 %v1431, %v1429
    %v1494 = vpack.c.bf16 %v1434, %v1432
    %v1495 = vpack.c.bf16 %v1435, %v1433
    %v1496 = vpack.c.bf16 %v1438, %v1436
    %v1497 = vpack.c.bf16 %v1439, %v1437
    %v1498 = vpack.c.bf16 %v1442, %v1440
    %v1499 = vpack.c.bf16 %v1443, %v1441
    %v1500 = vpack.c.bf16 %v1446, %v1444
    %v1501 = vpack.c.bf16 %v1447, %v1445
    %v1502 = vpack.c.bf16 %v1450, %v1448
    %v1503 = vpack.c.bf16 %v1451, %v1449
    %v1504 = vpack.c.bf16 %v1454, %v1452
    %v1505 = vpack.c.bf16 %v1455, %v1453
    %v1506 = vpack.c.bf16 %v1458, %v1456
    %v1507 = vpack.c.bf16 %v1459, %v1457
    %v1508 = vpack.c.bf16 %v1462, %v1460
    %v1509 = vpack.c.bf16 %v1463, %v1461
    %v1510 = vpack.c.bf16 %v1466, %v1464
    %v1511 = vpack.c.bf16 %v1467, %v1465
    %v1512 = vpack.c.bf16 %v1470, %v1468
    %v1513 = vpack.c.bf16 %v1471, %v1469
    %v1514 = vpack.c.bf16 %v1474, %v1472
    %v1515 = vpack.c.bf16 %v1475, %v1473
    %v1516 = vpack.c.bf16 %v1478, %v1476
    %v1517 = vpack.c.bf16 %v1479, %v1477
    %v1518 = vpack.c.bf16 %v1482, %v1480
    %v1519 = vpack.c.bf16 %v1483, %v1481
    %v1520 = vpack.c.bf16 %v1486, %v1484
    %v1521 = vpack.c.bf16 %v1487, %v1485
    %v1522 = vpack.c.bf16 %v1490, %v1488
    %v1523 = vpack.c.bf16 %v1491, %v1489
    %1524 = vxpose.xlu0.c.b16.start [1/8] %v1492, 128
    %1525 = vxpose.xlu0.c.b16.cont [2/8] %v1494, 128
    %1526 = vxpose.xlu0.c.b16.cont [3/8] %v1496, 128
    %1527 = vxpose.xlu0.c.b16.cont [4/8] %v1498, 128
    %1528 = vxpose.xlu0.c.b16.cont [5/8] %v1500, 128
    %1529 = vxpose.xlu0.c.b16.cont [6/8] %v1502, 128
    %1530 = vxpose.xlu0.c.b16.cont [7/8] %v1504, 128
    %1531 = vxpose.xlu0.c.b16.end [8/8] %v1506, 128
    %v1532 = vpop.trf.xlu0
    %v1533 = vpop.trf.xlu0
    %v1534 = vpop.trf.xlu0
    %v1535 = vpop.trf.xlu0
    %v1536 = vpop.trf.xlu0
    %v1537 = vpop.trf.xlu0
    %v1538 = vpop.trf.xlu0
    %v1539 = vpop.trf.xlu0
    %1540 = vxpose.xlu0.c.b16.start [1/8] %v1493, 128
    %1541 = vxpose.xlu0.c.b16.cont [2/8] %v1495, 128
    %1542 = vxpose.xlu0.c.b16.cont [3/8] %v1497, 128
    %1543 = vxpose.xlu0.c.b16.cont [4/8] %v1499, 128
    %1544 = vxpose.xlu0.c.b16.cont [5/8] %v1501, 128
    %1545 = vxpose.xlu0.c.b16.cont [6/8] %v1503, 128
    %1546 = vxpose.xlu0.c.b16.cont [7/8] %v1505, 128
    %1547 = vxpose.xlu0.c.b16.end [8/8] %v1507, 128
    %v1548 = vpop.trf.xlu0
    %v1549 = vpop.trf.xlu0
    %v1550 = vpop.trf.xlu0
    %v1551 = vpop.trf.xlu0
    %v1552 = vpop.trf.xlu0
    %v1553 = vpop.trf.xlu0
    %v1554 = vpop.trf.xlu0
    %v1555 = vpop.trf.xlu0
    %1556 = vxpose.xlu0.c.b16.start [1/8] %v1508, 128
    %1557 = vxpose.xlu0.c.b16.cont [2/8] %v1510, 128
    %1558 = vxpose.xlu0.c.b16.cont [3/8] %v1512, 128
    %1559 = vxpose.xlu0.c.b16.cont [4/8] %v1514, 128
    %1560 = vxpose.xlu0.c.b16.cont [5/8] %v1516, 128
    %1561 = vxpose.xlu0.c.b16.cont [6/8] %v1518, 128
    %1562 = vxpose.xlu0.c.b16.cont [7/8] %v1520, 128
    %1563 = vxpose.xlu0.c.b16.end [8/8] %v1522, 128
    %v1564 = vpop.trf.xlu0
    %v1565 = vpop.trf.xlu0
    %v1566 = vpop.trf.xlu0
    %v1567 = vpop.trf.xlu0
    %v1568 = vpop.trf.xlu0
    %v1569 = vpop.trf.xlu0
    %v1570 = vpop.trf.xlu0
    %v1571 = vpop.trf.xlu0
    %1572 = vxpose.xlu0.c.b16.start [1/8] %v1509, 128
    %1573 = vxpose.xlu0.c.b16.cont [2/8] %v1511, 128
    %1574 = vxpose.xlu0.c.b16.cont [3/8] %v1513, 128
    %1575 = vxpose.xlu0.c.b16.cont [4/8] %v1515, 128
    %1576 = vxpose.xlu0.c.b16.cont [5/8] %v1517, 128
    %1577 = vxpose.xlu0.c.b16.cont [6/8] %v1519, 128
    %1578 = vxpose.xlu0.c.b16.cont [7/8] %v1521, 128
    %1579 = vxpose.xlu0.c.b16.end [8/8] %v1523, 128
    %v1580 = vpop.trf.xlu0
    %v1581 = vpop.trf.xlu0
    %v1582 = vpop.trf.xlu0
    %v1583 = vpop.trf.xlu0
    %v1584 = vpop.trf.xlu0
    %v1585 = vpop.trf.xlu0
    %v1586 = vpop.trf.xlu0
    %v1587 = vpop.trf.xlu0
    %1588 = vmatprep.subr.bf16.mxu0 %v645
    %1589 = vmatpush1.bf16.msra.mxu0 %v644
    %1590 = vmatprep.subr.bf16.mxu0 %v639
    %1591 = vmatpush1.bf16.msra.mxu0 %v638
    %1592 = vmatprep.subr.bf16.mxu0 %v633
    %1593 = vmatpush1.bf16.msra.mxu0 %v632
    %1594 = vmatprep.subr.bf16.mxu0 %v627
    %1595 = vmatpush1.bf16.msra.mxu0 %v626
    %1596 = vmatprep.subr.bf16.mxu0 %v621
    %1597 = vmatpush1.bf16.msra.mxu0 %v620
    %1598 = vmatprep.subr.bf16.mxu0 %v615
    %1599 = vmatpush1.bf16.msra.mxu0 %v614
    %1600 = vmatprep.subr.bf16.mxu0 %v609
    %1601 = vmatpush1.bf16.msra.mxu0 %v608
    %1602 = vmatprep.subr.bf16.mxu0 %v603
    %1603 = vmatpush1.bf16.msra.mxu0 %v602
    %1604 = vmatprep.subr.bf16.mxu0 %v693
    %1605 = vmatpush2.bf16.msra.mxu0 %v692
    %1606 = vmatprep.subr.bf16.mxu0 %v687
    %1607 = vmatpush2.bf16.msra.mxu0 %v686
    %1608 = vmatprep.subr.bf16.mxu0 %v681
    %1609 = vmatpush2.bf16.msra.mxu0 %v680
    %1610 = vmatprep.subr.bf16.mxu0 %v675
    %1611 = vmatpush2.bf16.msra.mxu0 %v674
    %1612 = vmatprep.subr.bf16.mxu0 %v669
    %1613 = vmatpush2.bf16.msra.mxu0 %v668
    %1614 = vmatprep.subr.bf16.mxu0 %v663
    %1615 = vmatpush2.bf16.msra.mxu0 %v662
    %1616 = vmatprep.subr.bf16.mxu0 %v657
    %1617 = vmatpush2.bf16.msra.mxu0 %v656
    %1618 = vmatprep.subr.bf16.mxu0 %v651
    %1619 = vmatpush2.bf16.msra.mxu0 %v650
    %1620 = vmatprep.mubr.bf16.mxu0 %v1564
    %1621 = vmatmul.mubr.bf16.gmra.mxu0 %v1532
    %v1622 = vpop.f32.mrf.mxu0
    %v1623 = vadd.f32 %v223, %v1622
    %v1624 = vpop.f32.mrf.mxu0
    %v1625 = vadd.f32 %v227, %v1624
    %v1626 = vpop.f32.mrf.mxu0
    %v1627 = vadd.f32 %v223, %v1626
    %v1628 = vpop.f32.mrf.mxu0
    %v1629 = vadd.f32 %v227, %v1628
    %1630 = vmatprep.mubr.bf16.mxu0 %v1565
    %1631 = vmatmul.mubr.bf16.gmra.mxu0 %v1533
    %v1632 = vpop.f32.mrf.mxu0
    %v1633 = vadd.f32 %v223, %v1632
    %v1634 = vpop.f32.mrf.mxu0
    %v1635 = vadd.f32 %v227, %v1634
    %v1636 = vpop.f32.mrf.mxu0
    %v1637 = vadd.f32 %v223, %v1636
    %v1638 = vpop.f32.mrf.mxu0
    %v1639 = vadd.f32 %v227, %v1638
    %1640 = vmatprep.mubr.bf16.mxu0 %v1566
    %1641 = vmatmul.mubr.bf16.gmra.mxu0 %v1534
    %v1642 = vpop.f32.mrf.mxu0
    %v1643 = vadd.f32 %v223, %v1642
    %v1644 = vpop.f32.mrf.mxu0
    %v1645 = vadd.f32 %v227, %v1644
    %v1646 = vpop.f32.mrf.mxu0
    %v1647 = vadd.f32 %v223, %v1646
    %v1648 = vpop.f32.mrf.mxu0
    %v1649 = vadd.f32 %v227, %v1648
    %1650 = vmatprep.mubr.bf16.mxu0 %v1567
    %1651 = vmatmul.mubr.bf16.gmra.mxu0 %v1535
    %v1652 = vpop.f32.mrf.mxu0
    %v1653 = vadd.f32 %v223, %v1652
    %v1654 = vpop.f32.mrf.mxu0
    %v1655 = vadd.f32 %v227, %v1654
    %v1656 = vpop.f32.mrf.mxu0
    %v1657 = vadd.f32 %v223, %v1656
    %v1658 = vpop.f32.mrf.mxu0
    %v1659 = vadd.f32 %v227, %v1658
    %1660 = vmatprep.mubr.bf16.mxu0 %v1568
    %1661 = vmatmul.mubr.bf16.gmra.mxu0 %v1536
    %v1662 = vpop.f32.mrf.mxu0
    %v1663 = vadd.f32 %v223, %v1662
    %v1664 = vpop.f32.mrf.mxu0
    %v1665 = vadd.f32 %v227, %v1664
    %v1666 = vpop.f32.mrf.mxu0
    %v1667 = vadd.f32 %v223, %v1666
    %v1668 = vpop.f32.mrf.mxu0
    %v1669 = vadd.f32 %v227, %v1668
    %1670 = vmatprep.mubr.bf16.mxu0 %v1569
    %1671 = vmatmul.mubr.bf16.gmra.mxu0 %v1537
    %v1672 = vpop.f32.mrf.mxu0
    %v1673 = vadd.f32 %v223, %v1672
    %v1674 = vpop.f32.mrf.mxu0
    %v1675 = vadd.f32 %v227, %v1674
    %v1676 = vpop.f32.mrf.mxu0
    %v1677 = vadd.f32 %v223, %v1676
    %v1678 = vpop.f32.mrf.mxu0
    %v1679 = vadd.f32 %v227, %v1678
    %1680 = vmatprep.mubr.bf16.mxu0 %v1570
    %1681 = vmatmul.mubr.bf16.gmra.mxu0 %v1538
    %v1682 = vpop.f32.mrf.mxu0
    %v1683 = vadd.f32 %v223, %v1682
    %v1684 = vpop.f32.mrf.mxu0
    %v1685 = vadd.f32 %v227, %v1684
    %v1686 = vpop.f32.mrf.mxu0
    %v1687 = vadd.f32 %v223, %v1686
    %v1688 = vpop.f32.mrf.mxu0
    %v1689 = vadd.f32 %v227, %v1688
    %1690 = vmatprep.mubr.bf16.mxu0 %v1571
    %1691 = vmatmul.mubr.bf16.gmra.mxu0 %v1539
    %v1692 = vpop.f32.mrf.mxu0
    %v1693 = vadd.f32 %v223, %v1692
    %v1694 = vpop.f32.mrf.mxu0
    %v1695 = vadd.f32 %v227, %v1694
    %v1696 = vpop.f32.mrf.mxu0
    %v1697 = vadd.f32 %v223, %v1696
    %v1698 = vpop.f32.mrf.mxu0
    %v1699 = vadd.f32 %v227, %v1698
    %1700 = vmatprep.mubr.bf16.mxu0 %v1580
    %1701 = vmatmul.mubr.bf16.gmra.mxu0 %v1548
    %v1702 = vpop.f32.mrf.mxu0
    %v1703 = vadd.f32 %v223, %v1702
    %v1704 = vpop.f32.mrf.mxu0
    %v1705 = vadd.f32 %v227, %v1704
    %v1706 = vpop.f32.mrf.mxu0
    %v1707 = vadd.f32 %v223, %v1706
    %v1708 = vpop.f32.mrf.mxu0
    %v1709 = vadd.f32 %v227, %v1708
    %1710 = vmatprep.mubr.bf16.mxu0 %v1581
    %1711 = vmatmul.mubr.bf16.gmra.mxu0 %v1549
    %v1712 = vpop.f32.mrf.mxu0
    %v1713 = vadd.f32 %v223, %v1712
    %v1714 = vpop.f32.mrf.mxu0
    %v1715 = vadd.f32 %v227, %v1714
    %v1716 = vpop.f32.mrf.mxu0
    %v1717 = vadd.f32 %v223, %v1716
    %v1718 = vpop.f32.mrf.mxu0
    %v1719 = vadd.f32 %v227, %v1718
    %1720 = vmatprep.mubr.bf16.mxu0 %v1582
    %1721 = vmatmul.mubr.bf16.gmra.mxu0 %v1550
    %v1722 = vpop.f32.mrf.mxu0
    %v1723 = vadd.f32 %v223, %v1722
    %v1724 = vpop.f32.mrf.mxu0
    %v1725 = vadd.f32 %v227, %v1724
    %v1726 = vpop.f32.mrf.mxu0
    %v1727 = vadd.f32 %v223, %v1726
    %v1728 = vpop.f32.mrf.mxu0
    %v1729 = vadd.f32 %v227, %v1728
    %1730 = vmatprep.mubr.bf16.mxu0 %v1583
    %1731 = vmatmul.mubr.bf16.gmra.mxu0 %v1551
    %v1732 = vpop.f32.mrf.mxu0
    %v1733 = vadd.f32 %v223, %v1732
    %v1734 = vpop.f32.mrf.mxu0
    %v1735 = vadd.f32 %v227, %v1734
    %v1736 = vpop.f32.mrf.mxu0
    %v1737 = vadd.f32 %v223, %v1736
    %v1738 = vpop.f32.mrf.mxu0
    %v1739 = vadd.f32 %v227, %v1738
    %1740 = vmatprep.mubr.bf16.mxu0 %v1584
    %1741 = vmatmul.mubr.bf16.gmra.mxu0 %v1552
    %v1742 = vpop.f32.mrf.mxu0
    %v1743 = vadd.f32 %v223, %v1742
    %v1744 = vpop.f32.mrf.mxu0
    %v1745 = vadd.f32 %v227, %v1744
    %v1746 = vpop.f32.mrf.mxu0
    %v1747 = vpop.f32.mrf.mxu0
    %1748 = vdwg.mxu0
    %1749 = vmatprep.subr.bf16.mxu0 %v647
    %1750 = vmatpush1.bf16.msra.mxu0 %v646
    %1751 = vmatprep.subr.bf16.mxu0 %v641
    %1752 = vmatpush1.bf16.msra.mxu0 %v640
    %1753 = vmatprep.subr.bf16.mxu0 %v635
    %1754 = vmatpush1.bf16.msra.mxu0 %v634
    %1755 = vmatprep.subr.bf16.mxu0 %v629
    %1756 = vmatpush1.bf16.msra.mxu0 %v628
    %1757 = vmatprep.subr.bf16.mxu0 %v623
    %1758 = vmatpush1.bf16.msra.mxu0 %v622
    %1759 = vmatprep.subr.bf16.mxu0 %v617
    %1760 = vmatpush1.bf16.msra.mxu0 %v616
    %1761 = vmatprep.subr.bf16.mxu0 %v611
    %1762 = vmatpush1.bf16.msra.mxu0 %v610
    %1763 = vmatprep.subr.bf16.mxu0 %v605
    %1764 = vmatpush1.bf16.msra.mxu0 %v604
    %1765 = vmatprep.subr.bf16.mxu0 %v695
    %1766 = vmatpush2.bf16.msra.mxu0 %v694
    %1767 = vmatprep.subr.bf16.mxu0 %v689
    %1768 = vmatpush2.bf16.msra.mxu0 %v688
    %1769 = vmatprep.subr.bf16.mxu0 %v683
    %1770 = vmatpush2.bf16.msra.mxu0 %v682
    %1771 = vmatprep.subr.bf16.mxu0 %v677
    %1772 = vmatpush2.bf16.msra.mxu0 %v676
    %1773 = vmatprep.subr.bf16.mxu0 %v671
    %1774 = vmatpush2.bf16.msra.mxu0 %v670
    %1775 = vmatprep.subr.bf16.mxu0 %v665
    %1776 = vmatpush2.bf16.msra.mxu0 %v664
    %1777 = vmatprep.subr.bf16.mxu0 %v659
    %1778 = vmatpush2.bf16.msra.mxu0 %v658
    %1779 = vmatprep.subr.bf16.mxu0 %v653
    %1780 = vmatpush2.bf16.msra.mxu0 %v652
    %1781 = vmatprep.mubr.bf16.mxu0 %v1564
    %1782 = vmatmul.mubr.bf16.gmra.mxu0 %v1532
    %v1783 = vpop.f32.mrf.mxu0
    %v1784 = vadd.f32 %v231, %v1783
    %v1785 = vpop.f32.mrf.mxu0
    %v1786 = vadd.f32 %v235, %v1785
    %v1787 = vpop.f32.mrf.mxu0
    %v1788 = vadd.f32 %v231, %v1787
    %v1789 = vpop.f32.mrf.mxu0
    %v1790 = vadd.f32 %v235, %v1789
    %1791 = vmatprep.mubr.bf16.mxu0 %v1565
    %1792 = vmatmul.mubr.bf16.gmra.mxu0 %v1533
    %v1793 = vpop.f32.mrf.mxu0
    %v1794 = vadd.f32 %v231, %v1793
    %v1795 = vpop.f32.mrf.mxu0
    %v1796 = vadd.f32 %v235, %v1795
    %v1797 = vpop.f32.mrf.mxu0
    %v1798 = vadd.f32 %v231, %v1797
    %v1799 = vpop.f32.mrf.mxu0
    %v1800 = vadd.f32 %v235, %v1799
    %1801 = vmatprep.mubr.bf16.mxu0 %v1566
    %1802 = vmatmul.mubr.bf16.gmra.mxu0 %v1534
    %v1803 = vpop.f32.mrf.mxu0
    %v1804 = vadd.f32 %v231, %v1803
    %v1805 = vpop.f32.mrf.mxu0
    %v1806 = vadd.f32 %v235, %v1805
    %v1807 = vpop.f32.mrf.mxu0
    %v1808 = vadd.f32 %v231, %v1807
    %v1809 = vpop.f32.mrf.mxu0
    %v1810 = vadd.f32 %v235, %v1809
    %1811 = vmatprep.mubr.bf16.mxu0 %v1567
    %1812 = vmatmul.mubr.bf16.gmra.mxu0 %v1535
    %v1813 = vpop.f32.mrf.mxu0
    %v1814 = vadd.f32 %v231, %v1813
    %v1815 = vpop.f32.mrf.mxu0
    %v1816 = vadd.f32 %v235, %v1815
    %v1817 = vpop.f32.mrf.mxu0
    %v1818 = vadd.f32 %v231, %v1817
    %v1819 = vpop.f32.mrf.mxu0
    %v1820 = vadd.f32 %v235, %v1819
    %1821 = vmatprep.mubr.bf16.mxu0 %v1568
    %1822 = vmatmul.mubr.bf16.gmra.mxu0 %v1536
    %v1823 = vpop.f32.mrf.mxu0
    %v1824 = vadd.f32 %v231, %v1823
    %v1825 = vpop.f32.mrf.mxu0
    %v1826 = vadd.f32 %v235, %v1825
    %v1827 = vpop.f32.mrf.mxu0
    %v1828 = vadd.f32 %v231, %v1827
    %v1829 = vpop.f32.mrf.mxu0
    %v1830 = vadd.f32 %v235, %v1829
    %1831 = vmatprep.mubr.bf16.mxu0 %v1569
    %1832 = vmatmul.mubr.bf16.gmra.mxu0 %v1537
    %v1833 = vpop.f32.mrf.mxu0
    %v1834 = vadd.f32 %v231, %v1833
    %v1835 = vpop.f32.mrf.mxu0
    %v1836 = vadd.f32 %v235, %v1835
    %v1837 = vpop.f32.mrf.mxu0
    %v1838 = vadd.f32 %v231, %v1837
    %v1839 = vpop.f32.mrf.mxu0
    %v1840 = vadd.f32 %v235, %v1839
    %1841 = vmatprep.mubr.bf16.mxu0 %v1570
    %1842 = vmatmul.mubr.bf16.gmra.mxu0 %v1538
    %v1843 = vpop.f32.mrf.mxu0
    %v1844 = vadd.f32 %v231, %v1843
    %v1845 = vpop.f32.mrf.mxu0
    %v1846 = vadd.f32 %v235, %v1845
    %v1847 = vpop.f32.mrf.mxu0
    %v1848 = vadd.f32 %v231, %v1847
    %v1849 = vpop.f32.mrf.mxu0
    %v1850 = vadd.f32 %v235, %v1849
    %1851 = vmatprep.mubr.bf16.mxu0 %v1571
    %1852 = vmatmul.mubr.bf16.gmra.mxu0 %v1539
    %v1853 = vpop.f32.mrf.mxu0
    %v1854 = vadd.f32 %v231, %v1853
    %v1855 = vpop.f32.mrf.mxu0
    %v1856 = vadd.f32 %v235, %v1855
    %v1857 = vpop.f32.mrf.mxu0
    %v1858 = vadd.f32 %v231, %v1857
    %v1859 = vpop.f32.mrf.mxu0
    %v1860 = vadd.f32 %v235, %v1859
    %1861 = vmatprep.mubr.bf16.mxu0 %v1580
    %1862 = vmatmul.mubr.bf16.gmra.mxu0 %v1548
    %v1863 = vpop.f32.mrf.mxu0
    %v1864 = vadd.f32 %v231, %v1863
    %v1865 = vpop.f32.mrf.mxu0
    %v1866 = vadd.f32 %v235, %v1865
    %v1867 = vpop.f32.mrf.mxu0
    %v1868 = vadd.f32 %v231, %v1867
    %v1869 = vpop.f32.mrf.mxu0
    %v1870 = vadd.f32 %v235, %v1869
    %1871 = vmatprep.mubr.bf16.mxu0 %v1581
    %1872 = vmatmul.mubr.bf16.gmra.mxu0 %v1549
    %v1873 = vpop.f32.mrf.mxu0
    %v1874 = vadd.f32 %v231, %v1873
    %v1875 = vpop.f32.mrf.mxu0
    %v1876 = vadd.f32 %v235, %v1875
    %v1877 = vpop.f32.mrf.mxu0
    %v1878 = vadd.f32 %v231, %v1877
    %v1879 = vpop.f32.mrf.mxu0
    %v1880 = vadd.f32 %v235, %v1879
    %1881 = vmatprep.mubr.bf16.mxu0 %v1582
    %1882 = vmatmul.mubr.bf16.gmra.mxu0 %v1550
    %v1883 = vpop.f32.mrf.mxu0
    %v1884 = vadd.f32 %v231, %v1883
    %v1885 = vpop.f32.mrf.mxu0
    %v1886 = vadd.f32 %v235, %v1885
    %v1887 = vpop.f32.mrf.mxu0
    %v1888 = vadd.f32 %v231, %v1887
    %v1889 = vpop.f32.mrf.mxu0
    %v1890 = vadd.f32 %v235, %v1889
    %1891 = vmatprep.mubr.bf16.mxu0 %v1583
    %1892 = vmatmul.mubr.bf16.gmra.mxu0 %v1551
    %v1893 = vpop.f32.mrf.mxu0
    %v1894 = vadd.f32 %v231, %v1893
    %v1895 = vpop.f32.mrf.mxu0
    %v1896 = vadd.f32 %v235, %v1895
    %v1897 = vpop.f32.mrf.mxu0
    %v1898 = vadd.f32 %v231, %v1897
    %v1899 = vpop.f32.mrf.mxu0
    %v1900 = vadd.f32 %v235, %v1899
    %1901 = vmatprep.mubr.bf16.mxu0 %v1584
    %1902 = vmatmul.mubr.bf16.gmra.mxu0 %v1552
    %v1903 = vpop.f32.mrf.mxu0
    %v1904 = vadd.f32 %v231, %v1903
    %v1905 = vpop.f32.mrf.mxu0
    %v1906 = vadd.f32 %v235, %v1905
    %v1907 = vpop.f32.mrf.mxu0
    %v1908 = vpop.f32.mrf.mxu0
    %1909 = vdwg.mxu0
    %1910 = vmatprep.subr.bf16.mxu0 %v649
    %1911 = vmatpush1.bf16.msra.mxu0 %v648
    %1912 = vmatprep.subr.bf16.mxu0 %v643
    %1913 = vmatpush1.bf16.msra.mxu0 %v642
    %1914 = vmatprep.subr.bf16.mxu0 %v637
    %1915 = vmatpush1.bf16.msra.mxu0 %v636
    %1916 = vmatprep.subr.bf16.mxu0 %v631
    %1917 = vmatpush1.bf16.msra.mxu0 %v630
    %1918 = vmatprep.subr.bf16.mxu0 %v625
    %1919 = vmatpush1.bf16.msra.mxu0 %v624
    %1920 = vmatprep.subr.bf16.mxu0 %v619
    %1921 = vmatpush1.bf16.msra.mxu0 %v618
    %1922 = vmatprep.subr.bf16.mxu0 %v613
    %1923 = vmatpush1.bf16.msra.mxu0 %v612
    %1924 = vmatprep.subr.bf16.mxu0 %v607
    %1925 = vmatpush1.bf16.msra.mxu0 %v606
    %1926 = vmatprep.subr.bf16.mxu0 %v697
    %1927 = vmatpush2.bf16.msra.mxu0 %v696
    %1928 = vmatprep.subr.bf16.mxu0 %v691
    %1929 = vmatpush2.bf16.msra.mxu0 %v690
    %1930 = vmatprep.subr.bf16.mxu0 %v685
    %1931 = vmatpush2.bf16.msra.mxu0 %v684
    %1932 = vmatprep.subr.bf16.mxu0 %v679
    %1933 = vmatpush2.bf16.msra.mxu0 %v678
    %1934 = vmatprep.subr.bf16.mxu0 %v673
    %1935 = vmatpush2.bf16.msra.mxu0 %v672
    %1936 = vmatprep.subr.bf16.mxu0 %v667
    %1937 = vmatpush2.bf16.msra.mxu0 %v666
    %1938 = vmatprep.subr.bf16.mxu0 %v661
    %1939 = vmatpush2.bf16.msra.mxu0 %v660
    %1940 = vmatprep.subr.bf16.mxu0 %v655
    %1941 = vmatpush2.bf16.msra.mxu0 %v654
    %1942 = vmatprep.mubr.bf16.mxu0 %v1564
    %1943 = vmatmul.mubr.bf16.gmra.mxu0 %v1532
    %v1944 = vpop.f32.mrf.mxu0
    %v1945 = vadd.f32 %v239, %v1944
    %v1946 = vpop.f32.mrf.mxu0
    %v1947 = vadd.f32 %v243, %v1946
    %v1948 = vpop.f32.mrf.mxu0
    %v1949 = vadd.f32 %v239, %v1948
    %v1950 = vpop.f32.mrf.mxu0
    %v1951 = vadd.f32 %v243, %v1950
    %1952 = vmatprep.mubr.bf16.mxu0 %v1565
    %1953 = vmatmul.mubr.bf16.gmra.mxu0 %v1533
    %v1954 = vpop.f32.mrf.mxu0
    %v1955 = vadd.f32 %v239, %v1954
    %v1956 = vpop.f32.mrf.mxu0
    %v1957 = vadd.f32 %v243, %v1956
    %v1958 = vpop.f32.mrf.mxu0
    %v1959 = vadd.f32 %v239, %v1958
    %v1960 = vpop.f32.mrf.mxu0
    %v1961 = vadd.f32 %v243, %v1960
    %1962 = vmatprep.mubr.bf16.mxu0 %v1566
    %1963 = vmatmul.mubr.bf16.gmra.mxu0 %v1534
    %v1964 = vpop.f32.mrf.mxu0
    %v1965 = vadd.f32 %v239, %v1964
    %v1966 = vpop.f32.mrf.mxu0
    %v1967 = vadd.f32 %v243, %v1966
    %v1968 = vpop.f32.mrf.mxu0
    %v1969 = vadd.f32 %v239, %v1968
    %v1970 = vpop.f32.mrf.mxu0
    %v1971 = vadd.f32 %v243, %v1970
    %1972 = vmatprep.mubr.bf16.mxu0 %v1567
    %1973 = vmatmul.mubr.bf16.gmra.mxu0 %v1535
    %v1974 = vpop.f32.mrf.mxu0
    %v1975 = vadd.f32 %v239, %v1974
    %v1976 = vpop.f32.mrf.mxu0
    %v1977 = vadd.f32 %v243, %v1976
    %v1978 = vpop.f32.mrf.mxu0
    %v1979 = vadd.f32 %v239, %v1978
    %v1980 = vpop.f32.mrf.mxu0
    %v1981 = vadd.f32 %v243, %v1980
    %1982 = vmatprep.mubr.bf16.mxu0 %v1568
    %1983 = vmatmul.mubr.bf16.gmra.mxu0 %v1536
    %v1984 = vpop.f32.mrf.mxu0
    %v1985 = vadd.f32 %v239, %v1984
    %v1986 = vpop.f32.mrf.mxu0
    %v1987 = vadd.f32 %v243, %v1986
    %v1988 = vpop.f32.mrf.mxu0
    %v1989 = vadd.f32 %v239, %v1988
    %v1990 = vpop.f32.mrf.mxu0
    %v1991 = vadd.f32 %v243, %v1990
    %1992 = vmatprep.mubr.bf16.mxu0 %v1569
    %1993 = vmatmul.mubr.bf16.gmra.mxu0 %v1537
    %v1994 = vpop.f32.mrf.mxu0
    %v1995 = vadd.f32 %v239, %v1994
    %v1996 = vpop.f32.mrf.mxu0
    %v1997 = vadd.f32 %v243, %v1996
    %v1998 = vpop.f32.mrf.mxu0
    %v1999 = vadd.f32 %v239, %v1998
    %v2000 = vpop.f32.mrf.mxu0
    %v2001 = vadd.f32 %v243, %v2000
    %2002 = vmatprep.mubr.bf16.mxu0 %v1570
    %2003 = vmatmul.mubr.bf16.gmra.mxu0 %v1538
    %v2004 = vpop.f32.mrf.mxu0
    %v2005 = vadd.f32 %v239, %v2004
    %v2006 = vpop.f32.mrf.mxu0
    %v2007 = vadd.f32 %v243, %v2006
    %v2008 = vpop.f32.mrf.mxu0
    %v2009 = vadd.f32 %v239, %v2008
    %v2010 = vpop.f32.mrf.mxu0
    %v2011 = vadd.f32 %v243, %v2010
    %2012 = vmatprep.mubr.bf16.mxu0 %v1571
    %2013 = vmatmul.mubr.bf16.gmra.mxu0 %v1539
    %v2014 = vpop.f32.mrf.mxu0
    %v2015 = vadd.f32 %v239, %v2014
    %v2016 = vpop.f32.mrf.mxu0
    %v2017 = vadd.f32 %v243, %v2016
    %v2018 = vpop.f32.mrf.mxu0
    %v2019 = vadd.f32 %v239, %v2018
    %v2020 = vpop.f32.mrf.mxu0
    %v2021 = vadd.f32 %v243, %v2020
    %2022 = vmatprep.mubr.bf16.mxu0 %v1580
    %2023 = vmatmul.mubr.bf16.gmra.mxu0 %v1548
    %v2024 = vpop.f32.mrf.mxu0
    %v2025 = vadd.f32 %v239, %v2024
    %v2026 = vpop.f32.mrf.mxu0
    %v2027 = vadd.f32 %v243, %v2026
    %v2028 = vpop.f32.mrf.mxu0
    %v2029 = vadd.f32 %v239, %v2028
    %v2030 = vpop.f32.mrf.mxu0
    %v2031 = vadd.f32 %v243, %v2030
    %2032 = vmatprep.mubr.bf16.mxu0 %v1581
    %2033 = vmatmul.mubr.bf16.gmra.mxu0 %v1549
    %v2034 = vpop.f32.mrf.mxu0
    %v2035 = vadd.f32 %v239, %v2034
    %v2036 = vpop.f32.mrf.mxu0
    %v2037 = vadd.f32 %v243, %v2036
    %v2038 = vpop.f32.mrf.mxu0
    %v2039 = vadd.f32 %v239, %v2038
    %v2040 = vpop.f32.mrf.mxu0
    %v2041 = vadd.f32 %v243, %v2040
    %2042 = vmatprep.mubr.bf16.mxu0 %v1582
    %2043 = vmatmul.mubr.bf16.gmra.mxu0 %v1550
    %v2044 = vpop.f32.mrf.mxu0
    %v2045 = vadd.f32 %v239, %v2044
    %v2046 = vpop.f32.mrf.mxu0
    %v2047 = vadd.f32 %v243, %v2046
    %v2048 = vpop.f32.mrf.mxu0
    %v2049 = vadd.f32 %v239, %v2048
    %v2050 = vpop.f32.mrf.mxu0
    %v2051 = vadd.f32 %v243, %v2050
    %2052 = vmatprep.mubr.bf16.mxu0 %v1583
    %2053 = vmatmul.mubr.bf16.gmra.mxu0 %v1551
    %v2054 = vpop.f32.mrf.mxu0
    %v2055 = vadd.f32 %v239, %v2054
    %v2056 = vpop.f32.mrf.mxu0
    %v2057 = vadd.f32 %v243, %v2056
    %v2058 = vpop.f32.mrf.mxu0
    %v2059 = vadd.f32 %v239, %v2058
    %v2060 = vpop.f32.mrf.mxu0
    %v2061 = vadd.f32 %v243, %v2060
    %2062 = vmatprep.mubr.bf16.mxu0 %v1584
    %2063 = vmatmul.mubr.bf16.gmra.mxu0 %v1552
    %v2064 = vpop.f32.mrf.mxu0
    %v2065 = vadd.f32 %v239, %v2064
    %v2066 = vpop.f32.mrf.mxu0
    %v2067 = vadd.f32 %v243, %v2066
    %v2068 = vpop.f32.mrf.mxu0
    %v2069 = vpop.f32.mrf.mxu0
    %2070 = vdwg.mxu0
    %s2071 = scalar_lea.vmem %s3, 1200
    %2072 = vst [vmem:[%s2071] sm:$0xff] %v1623
    %2073 = vst [vmem:[%s2071 + $0x8] sm:$0xff] %v1625
    %2074 = vst [vmem:[%s2071 + $0x10] sm:$0xff] %v1784
    %2075 = vst [vmem:[%s2071 + $0x18] sm:$0xff] %v1786
    %2076 = vst [vmem:[%s2071 + $0x20] sm:$0xff] %v1945
    %2077 = vst [vmem:[%s2071 + $0x28] sm:$0xff] %v1947
    %2078 = vst [vmem:[%s2071 + $0x30] sm:$0xff] %v1627
    %2079 = vst [vmem:[%s2071 + $0x38] sm:$0xff] %v1629
    %2080 = vst [vmem:[%s2071 + $0x40] sm:$0xff] %v1788
    %2081 = vst [vmem:[%s2071 + $0x48] sm:$0xff] %v1790
    %2082 = vst [vmem:[%s2071 + $0x50] sm:$0xff] %v1949
    %2083 = vst [vmem:[%s2071 + $0x58] sm:$0xff] %v1951
    %2084 = vst [vmem:[%s2071 + $0x60] sm:$0xff] %v1633
    %2085 = vst [vmem:[%s2071 + $0x68] sm:$0xff] %v1635
    %2086 = vst [vmem:[%s2071 + $0x70] sm:$0xff] %v1794
    %2087 = vst [vmem:[%s2071 + $0x78] sm:$0xff] %v1796
    %2088 = vst [vmem:[%s2071 + $0x80] sm:$0xff] %v1955
    %2089 = vst [vmem:[%s2071 + $0x88] sm:$0xff] %v1957
    %2090 = vst [vmem:[%s2071 + $0x90] sm:$0xff] %v1637
    %2091 = vst [vmem:[%s2071 + $0x98] sm:$0xff] %v1639
    %2092 = vst [vmem:[%s2071 + $0xa0] sm:$0xff] %v1798
    %2093 = vst [vmem:[%s2071 + $0xa8] sm:$0xff] %v1800
    %2094 = vst [vmem:[%s2071 + $0xb0] sm:$0xff] %v1959
    %2095 = vst [vmem:[%s2071 + $0xb8] sm:$0xff] %v1961
    %2096 = vst [vmem:[%s2071 + $0xc0] sm:$0xff] %v1643
    %2097 = vst [vmem:[%s2071 + $0xc8] sm:$0xff] %v1645
    %2098 = vst [vmem:[%s2071 + $0xd0] sm:$0xff] %v1804
    %2099 = vst [vmem:[%s2071 + $0xd8] sm:$0xff] %v1806
    %2100 = vst [vmem:[%s2071 + $0xe0] sm:$0xff] %v1965
    %2101 = vst [vmem:[%s2071 + $0xe8] sm:$0xff] %v1967
    %2102 = vst [vmem:[%s2071 + $0xf0] sm:$0xff] %v1647
    %2103 = vst [vmem:[%s2071 + $0xf8] sm:$0xff] %v1649
    %2104 = vst [vmem:[%s2071 + $0x100] sm:$0xff] %v1808
    %2105 = vst [vmem:[%s2071 + $0x108] sm:$0xff] %v1810
    %2106 = vst [vmem:[%s2071 + $0x110] sm:$0xff] %v1969
    %2107 = vst [vmem:[%s2071 + $0x118] sm:$0xff] %v1971
    %2108 = vst [vmem:[%s2071 + $0x120] sm:$0xff] %v1653
    %2109 = vst [vmem:[%s2071 + $0x128] sm:$0xff] %v1655
    %2110 = vst [vmem:[%s2071 + $0x130] sm:$0xff] %v1814
    %2111 = vst [vmem:[%s2071 + $0x138] sm:$0xff] %v1816
    %2112 = vst [vmem:[%s2071 + $0x140] sm:$0xff] %v1975
    %2113 = vst [vmem:[%s2071 + $0x148] sm:$0xff] %v1977
    %2114 = vst [vmem:[%s2071 + $0x150] sm:$0xff] %v1657
    %2115 = vst [vmem:[%s2071 + $0x158] sm:$0xff] %v1659
    %2116 = vst [vmem:[%s2071 + $0x160] sm:$0xff] %v1818
    %2117 = vst [vmem:[%s2071 + $0x168] sm:$0xff] %v1820
    %2118 = vst [vmem:[%s2071 + $0x170] sm:$0xff] %v1979
    %2119 = vst [vmem:[%s2071 + $0x178] sm:$0xff] %v1981
    %2120 = vst [vmem:[%s2071 + $0x180] sm:$0xff] %v1663
    %2121 = vst [vmem:[%s2071 + $0x188] sm:$0xff] %v1665
    %2122 = vst [vmem:[%s2071 + $0x190] sm:$0xff] %v1824
    %2123 = vst [vmem:[%s2071 + $0x198] sm:$0xff] %v1826
    %2124 = vst [vmem:[%s2071 + $0x1a0] sm:$0xff] %v1985
    %2125 = vst [vmem:[%s2071 + $0x1a8] sm:$0xff] %v1987
    %2126 = vst [vmem:[%s2071 + $0x1b0] sm:$0xff] %v1667
    %2127 = vst [vmem:[%s2071 + $0x1b8] sm:$0xff] %v1669
    %2128 = vst [vmem:[%s2071 + $0x1c0] sm:$0xff] %v1828
    %2129 = vst [vmem:[%s2071 + $0x1c8] sm:$0xff] %v1830
    %2130 = vst [vmem:[%s2071 + $0x1d0] sm:$0xff] %v1989
    %2131 = vst [vmem:[%s2071 + $0x1d8] sm:$0xff] %v1991
    %2132 = vst [vmem:[%s2071 + $0x1e0] sm:$0xff] %v1673
    %2133 = vst [vmem:[%s2071 + $0x1e8] sm:$0xff] %v1675
    %2134 = vst [vmem:[%s2071 + $0x1f0] sm:$0xff] %v1834
    %2135 = vst [vmem:[%s2071 + $0x1f8] sm:$0xff] %v1836
    %2136 = vst [vmem:[%s2071 + $0x200] sm:$0xff] %v1995
    %2137 = vst [vmem:[%s2071 + $0x208] sm:$0xff] %v1997
    %2138 = vst [vmem:[%s2071 + $0x210] sm:$0xff] %v1677
    %2139 = vst [vmem:[%s2071 + $0x218] sm:$0xff] %v1679
    %2140 = vst [vmem:[%s2071 + $0x220] sm:$0xff] %v1838
    %2141 = vst [vmem:[%s2071 + $0x228] sm:$0xff] %v1840
    %2142 = vst [vmem:[%s2071 + $0x230] sm:$0xff] %v1999
    %2143 = vst [vmem:[%s2071 + $0x238] sm:$0xff] %v2001
    %2144 = vst [vmem:[%s2071 + $0x240] sm:$0xff] %v1683
    %2145 = vst [vmem:[%s2071 + $0x248] sm:$0xff] %v1685
    %2146 = vst [vmem:[%s2071 + $0x250] sm:$0xff] %v1844
    %2147 = vst [vmem:[%s2071 + $0x258] sm:$0xff] %v1846
    %2148 = vst [vmem:[%s2071 + $0x260] sm:$0xff] %v2005
    %2149 = vst [vmem:[%s2071 + $0x268] sm:$0xff] %v2007
    %2150 = vst [vmem:[%s2071 + $0x270] sm:$0xff] %v1687
    %2151 = vst [vmem:[%s2071 + $0x278] sm:$0xff] %v1689
    %2152 = vst [vmem:[%s2071 + $0x280] sm:$0xff] %v1848
    %2153 = vst [vmem:[%s2071 + $0x288] sm:$0xff] %v1850
    %2154 = vst [vmem:[%s2071 + $0x290] sm:$0xff] %v2009
    %2155 = vst [vmem:[%s2071 + $0x298] sm:$0xff] %v2011
    %2156 = vst [vmem:[%s2071 + $0x2a0] sm:$0xff] %v1693
    %2157 = vst [vmem:[%s2071 + $0x2a8] sm:$0xff] %v1695
    %2158 = vst [vmem:[%s2071 + $0x2b0] sm:$0xff] %v1854
    %2159 = vst [vmem:[%s2071 + $0x2b8] sm:$0xff] %v1856
    %2160 = vst [vmem:[%s2071 + $0x2c0] sm:$0xff] %v2015
    %2161 = vst [vmem:[%s2071 + $0x2c8] sm:$0xff] %v2017
    %2162 = vst [vmem:[%s2071 + $0x2d0] sm:$0xff] %v1697
    %2163 = vst [vmem:[%s2071 + $0x2d8] sm:$0xff] %v1699
    %2164 = vst [vmem:[%s2071 + $0x2e0] sm:$0xff] %v1858
    %2165 = vst [vmem:[%s2071 + $0x2e8] sm:$0xff] %v1860
    %2166 = vst [vmem:[%s2071 + $0x2f0] sm:$0xff] %v2019
    %2167 = vst [vmem:[%s2071 + $0x2f8] sm:$0xff] %v2021
    %2168 = vst [vmem:[%s2071 + $0x300] sm:$0xff] %v1703
    %2169 = vst [vmem:[%s2071 + $0x308] sm:$0xff] %v1705
    %2170 = vst [vmem:[%s2071 + $0x310] sm:$0xff] %v1864
    %2171 = vst [vmem:[%s2071 + $0x318] sm:$0xff] %v1866
    %2172 = vst [vmem:[%s2071 + $0x320] sm:$0xff] %v2025
    %2173 = vst [vmem:[%s2071 + $0x328] sm:$0xff] %v2027
    %2174 = vst [vmem:[%s2071 + $0x330] sm:$0xff] %v1707
    %2175 = vst [vmem:[%s2071 + $0x338] sm:$0xff] %v1709
    %2176 = vst [vmem:[%s2071 + $0x340] sm:$0xff] %v1868
    %2177 = vst [vmem:[%s2071 + $0x348] sm:$0xff] %v1870
    %2178 = vst [vmem:[%s2071 + $0x350] sm:$0xff] %v2029
    %2179 = vst [vmem:[%s2071 + $0x358] sm:$0xff] %v2031
    %2180 = vst [vmem:[%s2071 + $0x360] sm:$0xff] %v1713
    %2181 = vst [vmem:[%s2071 + $0x368] sm:$0xff] %v1715
    %2182 = vst [vmem:[%s2071 + $0x370] sm:$0xff] %v1874
    %2183 = vst [vmem:[%s2071 + $0x378] sm:$0xff] %v1876
    %2184 = vst [vmem:[%s2071 + $0x380] sm:$0xff] %v2035
    %2185 = vst [vmem:[%s2071 + $0x388] sm:$0xff] %v2037
    %2186 = vst [vmem:[%s2071 + $0x390] sm:$0xff] %v1717
    %2187 = vst [vmem:[%s2071 + $0x398] sm:$0xff] %v1719
    %2188 = vst [vmem:[%s2071 + $0x3a0] sm:$0xff] %v1878
    %2189 = vst [vmem:[%s2071 + $0x3a8] sm:$0xff] %v1880
    %2190 = vst [vmem:[%s2071 + $0x3b0] sm:$0xff] %v2039
    %2191 = vst [vmem:[%s2071 + $0x3b8] sm:$0xff] %v2041
    %2192 = vst [vmem:[%s2071 + $0x3c0] sm:$0xff] %v1723
    %2193 = vst [vmem:[%s2071 + $0x3c8] sm:$0xff] %v1725
    %2194 = vst [vmem:[%s2071 + $0x3d0] sm:$0xff] %v1884
    %2195 = vst [vmem:[%s2071 + $0x3d8] sm:$0xff] %v1886
    %2196 = vst [vmem:[%s2071 + $0x3e0] sm:$0xff] %v2045
    %2197 = vst [vmem:[%s2071 + $0x3e8] sm:$0xff] %v2047
    %2198 = vst [vmem:[%s2071 + $0x3f0] sm:$0xff] %v1727
    %2199 = vst [vmem:[%s2071 + $0x3f8] sm:$0xff] %v1729
    %2200 = vst [vmem:[%s2071 + $0x400] sm:$0xff] %v1888
    %2201 = vst [vmem:[%s2071 + $0x408] sm:$0xff] %v1890
    %2202 = vst [vmem:[%s2071 + $0x410] sm:$0xff] %v2049
    %2203 = vst [vmem:[%s2071 + $0x418] sm:$0xff] %v2051
    %2204 = vst [vmem:[%s2071 + $0x420] sm:$0xff] %v1733
    %2205 = vst [vmem:[%s2071 + $0x428] sm:$0xff] %v1735
    %2206 = vst [vmem:[%s2071 + $0x430] sm:$0xff] %v1894
    %2207 = vst [vmem:[%s2071 + $0x438] sm:$0xff] %v1896
    %2208 = vst [vmem:[%s2071 + $0x440] sm:$0xff] %v2055
    %2209 = vst [vmem:[%s2071 + $0x448] sm:$0xff] %v2057
    %2210 = vst [vmem:[%s2071 + $0x450] sm:$0xff] %v1737
    %2211 = vst [vmem:[%s2071 + $0x458] sm:$0xff] %v1739
    %2212 = vst [vmem:[%s2071 + $0x460] sm:$0xff] %v1898
    %2213 = vst [vmem:[%s2071 + $0x468] sm:$0xff] %v1900
    %2214 = vst [vmem:[%s2071 + $0x470] sm:$0xff] %v2059
    %2215 = vst [vmem:[%s2071 + $0x478] sm:$0xff] %v2061
    %2216 = vst [vmem:[%s2071 + $0x480] sm:$0xf] %v1743
    %2217 = vst [vmem:[%s2071 + $0x488] sm:$0xf] %v1745
    %2218 = vst [vmem:[%s2071 + $0x490] sm:$0xf] %v1904
    %2219 = vst [vmem:[%s2071 + $0x498] sm:$0xf] %v1906
    %2220 = vst [vmem:[%s2071 + $0x4a0] sm:$0xf] %v2065
    %2221 = vst [vmem:[%s2071 + $0x4a8] sm:$0xf] %v2067
    // Predicated region
    $region18: #{patch_embed.1} parent=1 // pred_check
      _
    $region19: #{patch_embed.1} parent=1 // pred_check_branch
      %2223 = sbr.rel (0) target = $region21
    $region20: #{patch_embed.1} parent=1 // pred_region
      _
    $region21: #{patch_embed.1} parent=1 // pred_fallthru
      _
    // Predicated region
    $region22: #{patch_embed.1} parent=1 // pred_check
      _
    $region23: #{patch_embed.1} parent=1 // pred_check_branch
      %2225 = sbr.rel (0) target = $region25
    $region24: #{patch_embed.1} parent=1 // pred_region
      _
    $region25: #{patch_embed.1} parent=1 // pred_fallthru
      _
    %2226 = vsyncpa [#allocation3], 1

</llo_original>
